<compile_context>
chip_gen: v7x
topology: tpu7x:2x2x1
jax: 0.10.0
libtpu: 0.0.40
codegen_flags: <defaults>
</compile_context>

<pallas_src>
import jax
import jax.numpy as jnp
from jax.experimental import pallas as pl
from jax.experimental.pallas import tpu as pltpu


# -----------------------------------------------------------------------------
# Pallas kernel: one query-tile step of the ImplicitSO3 MLP (full batch).
# -----------------------------------------------------------------------------
def implicit_so3_kernel(out_b_ref,  # (1,)        f32  SMEM  final Linear bias
                        bias_ref,   # (BS, 1, Hp) f32  per-batch vis_emb + biases
                        pose_ref,   # (BS, TQ, Q) f32  encoded query tile (unpadded lanes)
                        wp_ref,     # (Q, Hp)     bf16 FC_pose_query_emb.weight.T
                        wh_ref,     # (L, Hp, Hp) bf16 hidden Linear weights ([in,out])
                        bh_ref,     # (L, 1, Hp)  f32  hidden biases
                        wo_ref,     # (1, Hp)     f32  final Linear weight row
                        out_ref):   # (BS, TQ)    f32  lane-dense logits
    bs = bias_ref.shape[0]
    n_hidden = wh_ref.shape[0]
    ob = out_b_ref[0]                                               # scalar f32

    for b in range(bs):                                             # static unroll
        # pose embedding: bf16 MXU with f32 accumulation, K = q_dim (unpadded).
        x = pose_ref[b].astype(jnp.bfloat16)                        # (TQ, Q)
        h = jnp.dot(x, wp_ref[...],
                    preferred_element_type=jnp.float32)             # (TQ, Hp) f32
        # hoisted per-batch bias (vis_emb + b_vis + b_pose), ReLU, store bf16.
        h = jnp.maximum(h + bias_ref[b], 0.0).astype(jnp.bfloat16)

        # hidden MLP layers (static unroll): bf16 MXU / f32 acc, f32 bias+ReLU,
        # re-store bf16 (halves activation load/store traffic).
        for i in range(n_hidden):
            a = jnp.dot(h, wh_ref[i], preferred_element_type=jnp.float32)
            h = jnp.maximum(a + bh_ref[i], 0.0).astype(jnp.bfloat16)

        # Final Linear(H -> 1): VPU multiply + lane (XLU) reduction, add out_b,
        # write one lane-dense row of the (BS, TQ) output block.
        logits = jnp.sum(h.astype(jnp.float32) * wo_ref[...], axis=-1)   # (TQ,)
        out_ref[b, :] = logits + ob


# -----------------------------------------------------------------------------
# Wrapper: weight prep, hoisted vis_emb, VMEM-aware tiling, pallas_call.
# -----------------------------------------------------------------------------
def _round_up(x, m):
    return (x + m - 1) // m * m


def _vmem_estimate_bytes(bs, tq, q_dim, hp, n_hidden):
    """Conservative VMEM footprint estimate (double-buffered I/O + temporaries)."""
    lane = lambda d: _round_up(d, 128)
    sub = lambda d: _round_up(max(d, 1), 8)
    pose_tiles = 2 * bs * sub(tq) * lane(q_dim) * 4        # f32 pose tile, 2 buffers
    out_tiles = 2 * sub(bs) * lane(tq) * 4                 # f32 logits block, 2 buffers
    weights = 2 * (sub(q_dim) * hp * 2                      # wp bf16
                   + n_hidden * hp * hp * 2                 # wh bf16
                   + n_hidden * 8 * hp * 4                  # bh f32
                   + 8 * hp * 4 + 8 * hp * 4)               # wo + bias rows
    acts = 4 * tq * hp * 4                                  # (TQ,Hp) temporaries
    return pose_tiles + out_tiles + weights + acts


def implicit_so3_forward(feat_vec, pose_query, params, *, tile_q=2048):
    """feat_vec: [BS, feat_dim] f32; pose_query: [BS, N, rot_query_dim] f32.
    Returns logits of shape [BS, N, 1] (same as the PyTorch module forward)."""
    bs = feat_vec.shape[0]
    n, q_dim = pose_query.shape[1], pose_query.shape[2]
    hidden = params["FC_vis_w"].shape[0]
    n_hidden = params["mlp_w"].shape[0]

    f32, bf16 = jnp.float32, jnp.bfloat16
    hp = _round_up(hidden, 128)                     # lane-padded hidden width

    # Query tile: large (amortise ~0.35 us/grid-step overhead), multiple of 128,
    # capped by N; shrink only if the VMEM estimate exceeds the budget that is
    # safe even under v7x's 32 MiB scoped default.
    tq = max(128, min(_round_up(tile_q, 128), _round_up(n, 128)))
    vmem_budget = 24 * 1024 * 1024
    while tq > 128 and _vmem_estimate_bytes(bs, tq, q_dim, hp, n_hidden) > vmem_budget:
        tq = max(128, _round_up(tq // 2, 128))
    n_pad = _round_up(n, tq)
    n_tiles = n_pad // tq
    # NOTE(v7x): with N=2^15 and tq=2048 this gives 16 even "parallel" tiles for
    # the two TensorCores; small N degenerates to a single tile (still correct).

    # --- hoisted per-batch bias: FC_vis_emb(feat) + b_vis + b_pose (plain XLA) ---
    bias = (feat_vec @ params["FC_vis_w"].T
            + params["FC_vis_b"] + params["FC_pose_b"])               # (BS, H) f32
    bias = jnp.pad(bias, ((0, 0), (0, hp - hidden))).astype(f32).reshape(bs, 1, hp)

    # --- weights: [in, out], lane-pad the OUT dim only, bf16 for the MXU ---
    wp = jnp.pad(params["FC_pose_w"].T,
                 ((0, 0), (0, hp - hidden))).astype(bf16)             # (Q, Hp)
    wh = jnp.pad(jnp.transpose(params["mlp_w"], (0, 2, 1)),
                 ((0, 0), (0, hp - hidden), (0, hp - hidden))).astype(bf16)
    bh = jnp.pad(params["mlp_b"], ((0, 0), (0, hp - hidden))).astype(f32)[:, None, :]
    wo = jnp.pad(params["out_w"], ((0, 0), (0, hp - hidden))).astype(f32)   # (1, Hp)
    out_b = params["out_b"].reshape(1).astype(f32)                    # (1,) SMEM scalar

    # --- pose queries: f32, lane-UNpadded (q_dim stays 36); pad rows only if
    #     N is not a tile multiple (avoids the 3.56x padded-HBM inflation and
    #     the extra wrapper pad+cast pass flagged in the review). ---
    pose = pose_query.astype(f32)
    if n_pad != n:
        pose = jnp.pad(pose, ((0, 0), (0, n_pad - n), (0, 0)))

    out = pl.pallas_call(
        implicit_so3_kernel,
        out_shape=jax.ShapeDtypeStruct((bs, n_pad), f32),
        grid=(n_tiles,),
        in_specs=[
            pl.BlockSpec(memory_space=pltpu.MemorySpace.SMEM),         # out_b scalar
            pl.BlockSpec((bs, 1, hp), lambda t: (0, 0, 0)),            # bias (resident)
            pl.BlockSpec((bs, tq, q_dim), lambda t: (0, t, 0)),        # pose tile
            pl.BlockSpec((q_dim, hp), lambda t: (0, 0)),               # wp (resident)
            pl.BlockSpec((n_hidden, hp, hp), lambda t: (0, 0, 0)),     # wh (resident)
            pl.BlockSpec((n_hidden, 1, hp), lambda t: (0, 0, 0)),      # bh (resident)
            pl.BlockSpec((1, hp), lambda t: (0, 0)),                   # wo (resident)
        ],
        out_specs=pl.BlockSpec((bs, tq), lambda t: (0, t)),            # lane-dense logits
        compiler_params=pltpu.CompilerParams(
            dimension_semantics=("parallel",)),
    )(out_b, bias, pose, wp, wh, bh, wo)

    # Padded query rows (n..n_pad) hold garbage logits; slice them off here.
    logits = out if n_pad == n else out[:, :n]
    return logits[:, :, None]                                         # [BS, N, 1]


# -----------------------------------------------------------------------------
# Module glue: positional encoding, stand-in feature extractor, params, refs.
# -----------------------------------------------------------------------------
def positional_encoding(rot_flat, num_fourier_comp):
    """rot_flat: [..., 9]. Mirrors ImplicitSO3._positional_encoding."""
    if num_fourier_comp == 0:
        return rot_flat
    freqs = 2.0 ** jnp.arange(num_fourier_comp, dtype=jnp.float32)
    parts = []
    for f in freqs:
        parts.append(jnp.concatenate(
            [jnp.sin(rot_flat * f), jnp.cos(rot_flat * f)], axis=-1))
    return jnp.concatenate(parts, axis=-1)


def feature_extractor(img, w, b):
    # TODO(synk): the real feature extractor is an external pretrained ResNet;
    # it is not part of ImplicitSO3, so a deterministic GAP+Linear+ReLU stand-in
    # is used here (plain JAX glue).
    pooled = jnp.mean(img, axis=(2, 3))               # [BS, Ch]
    return jnp.maximum(pooled @ w.T + b, 0.0)         # [BS, feat_dim]


def init_params(key, feat_dim, rot_query_dim, mlp_layer_sizes):
    """Deterministic parameter init matching nn.Linear shapes ([out, in])."""
    h0 = mlp_layer_sizes[0]
    ks = jax.random.split(key, 8)

    def lin(k, out_d, in_d):
        bound = 1.0 / jnp.sqrt(in_d)
        kw, kb = jax.random.split(k)
        w = jax.random.uniform(kw, (out_d, in_d), jnp.float32, -bound, bound)
        b = jax.random.uniform(kb, (out_d,), jnp.float32, -bound, bound)
        return w, b

    fc_vis_w, fc_vis_b = lin(ks[0], h0, feat_dim)
    fc_pose_w, fc_pose_b = lin(ks[1], h0, rot_query_dim)
    mlp_w, mlp_b = [], []
    for i in range(1, len(mlp_layer_sizes)):
        w, b = lin(ks[1 + i], mlp_layer_sizes[i], mlp_layer_sizes[i - 1])
        mlp_w.append(w)
        mlp_b.append(b)
    out_w, out_b = lin(ks[7], 1, mlp_layer_sizes[-1])
    return {
        "FC_vis_w": fc_vis_w, "FC_vis_b": fc_vis_b,
        "FC_pose_w": fc_pose_w, "FC_pose_b": fc_pose_b,
        "mlp_w": jnp.stack(mlp_w), "mlp_b": jnp.stack(mlp_b),
        "out_w": out_w, "out_b": out_b,
    }


def reference_forward(feat_vec, pose_query, params):
    """Pure-JAX f32 reference of ImplicitSO3.forward (post feature extraction)."""
    vis_emb = feat_vec @ params["FC_vis_w"].T + params["FC_vis_b"]        # [BS, H]
    pose_emb = pose_query @ params["FC_pose_w"].T + params["FC_pose_b"]   # [BS, N, H]
    out = jax.nn.relu(vis_emb[:, None, :] + pose_emb)
    for i in range(params["mlp_w"].shape[0]):
        out = jax.nn.relu(out @ params["mlp_w"][i].T + params["mlp_b"][i])
    return out @ params["out_w"].T + params["out_b"]                      # [BS, N, 1]


def reference_forward_bf16(feat_vec, pose_query, params):
    """Reference mirroring the kernel's bf16-matmul / bf16-activation scheme."""
    bf = jnp.bfloat16
    bias = (feat_vec @ params["FC_vis_w"].T
            + params["FC_vis_b"] + params["FC_pose_b"])                   # f32
    h = jnp.einsum("bnq,hq->bnh", pose_query.astype(bf),
                   params["FC_pose_w"].astype(bf),
                   preferred_element_type=jnp.float32)
    h = jax.nn.relu(h + bias[:, None, :]).astype(bf)
    for i in range(params["mlp_w"].shape[0]):
        a = jnp.einsum("bnh,kh->bnk", h, params["mlp_w"][i].astype(bf),
                       preferred_element_type=jnp.float32)
        h = jax.nn.relu(a + params["mlp_b"][i]).astype(bf)
    logits = (jnp.sum(h.astype(jnp.float32) * params["out_w"][0], axis=-1)
              + params["out_b"][0])
    return logits[..., None]


# -----------------------------------------------------------------------------
if __name__ == "__main__":
    key = jax.random.PRNGKey(0)
    k_img, k_rot, k_fe, k_params = jax.random.split(key, 4)

    # Small shapes consistent with the module.
    BS, CH, HW = 2, 4, 16
    N_QUERIES = 8
    FEAT_DIM = 32
    NUM_FOURIER = 2
    MLP_LAYER_SIZES = [32] * 4
    ROT_QUERY_DIM = 9 * NUM_FOURIER * 2  # 36

    # Inputs: image [BS, Ch, H, W] (NCHW), query rotations [BS, N, 3, 3].
    img = jax.random.normal(k_img, (BS, CH, HW, HW), jnp.float32)
    pose_query_mats = jax.random.normal(k_rot, (BS, N_QUERIES, 3, 3), jnp.float32)

    # Stand-in feature extractor params (external to ImplicitSO3).
    fe_w = jax.random.normal(k_fe, (FEAT_DIM, CH), jnp.float32) * 0.1
    fe_b = jnp.zeros((FEAT_DIM,), jnp.float32)

    # ImplicitSO3 params.
    params = init_params(k_params, FEAT_DIM, ROT_QUERY_DIM, MLP_LAYER_SIZES)

    # forward(): flatten rotation, positionally encode, extract features.
    pose_flat = pose_query_mats.reshape(BS, N_QUERIES, 9)
    pose_enc = positional_encoding(pose_flat, NUM_FOURIER)   # [BS, N, 36]
    feat_vec = feature_extractor(img, fe_w, fe_b)            # [BS, FEAT_DIM]

    logits = implicit_so3_forward(feat_vec, pose_enc, params)
    logits = jax.block_until_ready(logits)
    assert logits.shape == (BS, N_QUERIES, 1)

    # Tight check vs a reference using the same bf16 matmul/activation scheme,
    # loose sanity check vs the full-f32 reference.
    ref_bf = reference_forward_bf16(feat_vec, pose_enc, params)
    ref_32 = reference_forward(feat_vec, pose_enc, params)
    err_bf = float(jnp.max(jnp.abs(logits - ref_bf)))
    err_32 = float(jnp.max(jnp.abs(logits - ref_32)))
    assert jnp.allclose(logits, ref_bf, atol=1e-2, rtol=1e-2), (
        f"bf16-matched reference mismatch, max abs err {err_bf}")
    assert jnp.allclose(logits, ref_32, atol=1e-1, rtol=1e-1), (
        f"f32 reference mismatch, max abs err {err_32}")

    print("KERNEL_OK")
</pallas_src>

<mosaic_0001>
module attributes {stable_mosaic.version = 11 : i64} {
  func.func @implicit_so3_kernel(%arg0: i32, %arg1: memref<1xf32, #tpu.memory_space<smem>>, %arg2: memref<2x1x128xf32, #tpu.memory_space<vmem>>, %arg3: memref<2x128x36xf32, #tpu.memory_space<vmem>>, %arg4: memref<36x128xbf16, #tpu.memory_space<vmem>>, %arg5: memref<3x128x128xbf16, #tpu.memory_space<vmem>>, %arg6: memref<3x1x128xf32, #tpu.memory_space<vmem>>, %arg7: memref<1x128xf32, #tpu.memory_space<vmem>>, %arg8: memref<2x128xf32, #tpu.memory_space<vmem>>) attributes {dimension_semantics = [#tpu.dimension_semantics<parallel>], iteration_bounds = array<i64: 1>, scalar_prefetch = 0 : i64, scratch_operands = 0 : i64, tpu.core_type = #tpu.core_type<tc>, window_params = [{transform_indices = @transform_0, window_bounds = array<i64: 1>}, {pipeline_mode = #tpu.pipeline_mode<synchronous>, transform_indices = @transform_1, window_bounds = array<i64: 2, 1, 128>}, {transform_indices = @transform_2, window_bounds = array<i64: 2, 128, 36>}, {pipeline_mode = #tpu.pipeline_mode<synchronous>, transform_indices = @transform_3, window_bounds = array<i64: 36, 128>}, {pipeline_mode = #tpu.pipeline_mode<synchronous>, transform_indices = @transform_4, window_bounds = array<i64: 3, 128, 128>}, {pipeline_mode = #tpu.pipeline_mode<synchronous>, transform_indices = @transform_5, window_bounds = array<i64: 3, 1, 128>}, {pipeline_mode = #tpu.pipeline_mode<synchronous>, transform_indices = @transform_6, window_bounds = array<i64: 1, 128>}, {transform_indices = @transform_7, window_bounds = array<i64: 2, 128>}]} {
    %c0 = arith.constant 0 : index
    %0 = memref.load %arg1[%c0] : memref<1xf32, #tpu.memory_space<smem>>
    %c0_0 = arith.constant 0 : index
    %c0_1 = arith.constant 0 : index
    %c0_2 = arith.constant 0 : index
    %1 = vector.load %arg3[%c0_0, %c0_1, %c0_2] : memref<2x128x36xf32, #tpu.memory_space<vmem>>, vector<1x128x36xf32>
    %2 = vector.shape_cast %1 : vector<1x128x36xf32> to vector<128x36xf32>
    %3 = arith.truncf %2 : vector<128x36xf32> to vector<128x36xbf16>
    %c0_3 = arith.constant 0 : index
    %c0_4 = arith.constant 0 : index
    %4 = vector.load %arg4[%c0_3, %c0_4] : memref<36x128xbf16, #tpu.memory_space<vmem>>, vector<36x128xbf16>
    %cst = arith.constant dense<0.000000e+00> : vector<128x128xf32>
    %5 = tpu.matmul %3, %4, %cst {dimension_numbers = #tpu.dot_dimension_numbers<[1], [0], [0], [1], [0, 0, 1, 1], [], []>} : vector<128x36xbf16>, vector<36x128xbf16>, vector<128x128xf32> -> vector<128x128xf32>
    %c0_5 = arith.constant 0 : index
    %c0_6 = arith.constant 0 : index
    %c0_7 = arith.constant 0 : index
    %6 = vector.load %arg2[%c0_5, %c0_6, %c0_7] : memref<2x1x128xf32, #tpu.memory_space<vmem>>, vector<1x1x128xf32>
    %7 = vector.shape_cast %6 : vector<1x1x128xf32> to vector<1x128xf32>
    %8 = vector.broadcast %7 : vector<1x128xf32> to vector<128x128xf32>
    %9 = arith.addf %5, %8 : vector<128x128xf32>
    %cst_8 = arith.constant 0.000000e+00 : f32
    %10 = vector.broadcast %cst_8 : f32 to vector<128x128xf32>
    %11 = arith.maximumf %9, %10 : vector<128x128xf32>
    %12 = arith.truncf %11 : vector<128x128xf32> to vector<128x128xbf16>
    %c0_9 = arith.constant 0 : index
    %c0_10 = arith.constant 0 : index
    %c0_11 = arith.constant 0 : index
    %13 = vector.load %arg5[%c0_9, %c0_10, %c0_11] : memref<3x128x128xbf16, #tpu.memory_space<vmem>>, vector<1x128x128xbf16>
    %14 = vector.shape_cast %13 : vector<1x128x128xbf16> to vector<128x128xbf16>
    %cst_12 = arith.constant dense<0.000000e+00> : vector<128x128xf32>
    %15 = tpu.matmul %12, %14, %cst_12 {dimension_numbers = #tpu.dot_dimension_numbers<[1], [0], [0], [1], [0, 0, 1, 1], [], []>} : vector<128x128xbf16>, vector<128x128xbf16>, vector<128x128xf32> -> vector<128x128xf32>
    %c0_13 = arith.constant 0 : index
    %c0_14 = arith.constant 0 : index
    %c0_15 = arith.constant 0 : index
    %16 = vector.load %arg6[%c0_13, %c0_14, %c0_15] : memref<3x1x128xf32, #tpu.memory_space<vmem>>, vector<1x1x128xf32>
    %17 = vector.shape_cast %16 : vector<1x1x128xf32> to vector<1x128xf32>
    %18 = vector.broadcast %17 : vector<1x128xf32> to vector<128x128xf32>
    %19 = arith.addf %15, %18 : vector<128x128xf32>
    %cst_16 = arith.constant 0.000000e+00 : f32
    %20 = vector.broadcast %cst_16 : f32 to vector<128x128xf32>
    %21 = arith.maximumf %19, %20 : vector<128x128xf32>
    %22 = arith.truncf %21 : vector<128x128xf32> to vector<128x128xbf16>
    %c1 = arith.constant 1 : index
    %c0_17 = arith.constant 0 : index
    %c0_18 = arith.constant 0 : index
    %23 = vector.load %arg5[%c1, %c0_17, %c0_18] : memref<3x128x128xbf16, #tpu.memory_space<vmem>>, vector<1x128x128xbf16>
    %24 = vector.shape_cast %23 : vector<1x128x128xbf16> to vector<128x128xbf16>
    %cst_19 = arith.constant dense<0.000000e+00> : vector<128x128xf32>
    %25 = tpu.matmul %22, %24, %cst_19 {dimension_numbers = #tpu.dot_dimension_numbers<[1], [0], [0], [1], [0, 0, 1, 1], [], []>} : vector<128x128xbf16>, vector<128x128xbf16>, vector<128x128xf32> -> vector<128x128xf32>
    %c1_20 = arith.constant 1 : index
    %c0_21 = arith.constant 0 : index
    %c0_22 = arith.constant 0 : index
    %26 = vector.load %arg6[%c1_20, %c0_21, %c0_22] : memref<3x1x128xf32, #tpu.memory_space<vmem>>, vector<1x1x128xf32>
    %27 = vector.shape_cast %26 : vector<1x1x128xf32> to vector<1x128xf32>
    %28 = vector.broadcast %27 : vector<1x128xf32> to vector<128x128xf32>
    %29 = arith.addf %25, %28 : vector<128x128xf32>
    %cst_23 = arith.constant 0.000000e+00 : f32
    %30 = vector.broadcast %cst_23 : f32 to vector<128x128xf32>
    %31 = arith.maximumf %29, %30 : vector<128x128xf32>
    %32 = arith.truncf %31 : vector<128x128xf32> to vector<128x128xbf16>
    %c2 = arith.constant 2 : index
    %c0_24 = arith.constant 0 : index
    %c0_25 = arith.constant 0 : index
    %33 = vector.load %arg5[%c2, %c0_24, %c0_25] : memref<3x128x128xbf16, #tpu.memory_space<vmem>>, vector<1x128x128xbf16>
    %34 = vector.shape_cast %33 : vector<1x128x128xbf16> to vector<128x128xbf16>
    %cst_26 = arith.constant dense<0.000000e+00> : vector<128x128xf32>
    %35 = tpu.matmul %32, %34, %cst_26 {dimension_numbers = #tpu.dot_dimension_numbers<[1], [0], [0], [1], [0, 0, 1, 1], [], []>} : vector<128x128xbf16>, vector<128x128xbf16>, vector<128x128xf32> -> vector<128x128xf32>
    %c2_27 = arith.constant 2 : index
    %c0_28 = arith.constant 0 : index
    %c0_29 = arith.constant 0 : index
    %36 = vector.load %arg6[%c2_27, %c0_28, %c0_29] : memref<3x1x128xf32, #tpu.memory_space<vmem>>, vector<1x1x128xf32>
    %37 = vector.shape_cast %36 : vector<1x1x128xf32> to vector<1x128xf32>
    %38 = vector.broadcast %37 : vector<1x128xf32> to vector<128x128xf32>
    %39 = arith.addf %35, %38 : vector<128x128xf32>
    %cst_30 = arith.constant 0.000000e+00 : f32
    %40 = vector.broadcast %cst_30 : f32 to vector<128x128xf32>
    %41 = arith.maximumf %39, %40 : vector<128x128xf32>
    %42 = arith.truncf %41 : vector<128x128xf32> to vector<128x128xbf16>
    %43 = arith.extf %42 : vector<128x128xbf16> to vector<128x128xf32>
    %c0_31 = arith.constant 0 : index
    %c0_32 = arith.constant 0 : index
    %44 = vector.load %arg7[%c0_31, %c0_32] : memref<1x128xf32, #tpu.memory_space<vmem>>, vector<1x128xf32>
    %45 = vector.broadcast %44 : vector<1x128xf32> to vector<128x128xf32>
    %46 = arith.mulf %43, %45 : vector<128x128xf32>
    %cst_33 = arith.constant dense<0.000000e+00> : vector<128xf32>
    %47 = vector.multi_reduction <add>, %46, %cst_33 [1] : vector<128x128xf32> to vector<128xf32>
    %48 = vector.broadcast %0 : f32 to vector<128xf32>
    %49 = arith.addf %47, %48 : vector<128xf32>
    %c0_34 = arith.constant 0 : index
    %c0_35 = arith.constant 0 : index
    %50 = vector.load %arg8[%c0_34, %c0_35] : memref<2x128xf32, #tpu.memory_space<vmem>>, vector<1x128xf32>
    %51 = vector.shape_cast %50 : vector<1x128xf32> to vector<128xf32>
    %52 = vector.shape_cast %49 : vector<128xf32> to vector<1x128xf32>
    tpu.vector_store %arg8[%c0_34, %c0_35], %52 {strides = array<i32>} : memref<2x128xf32, #tpu.memory_space<vmem>>, vector<1x128xf32>,
    %c1_36 = arith.constant 1 : index
    %c0_37 = arith.constant 0 : index
    %c0_38 = arith.constant 0 : index
    %53 = vector.load %arg3[%c1_36, %c0_37, %c0_38] : memref<2x128x36xf32, #tpu.memory_space<vmem>>, vector<1x128x36xf32>
    %54 = vector.shape_cast %53 : vector<1x128x36xf32> to vector<128x36xf32>
    %55 = arith.truncf %54 : vector<128x36xf32> to vector<128x36xbf16>
    %c0_39 = arith.constant 0 : index
    %c0_40 = arith.constant 0 : index
    %56 = vector.load %arg4[%c0_39, %c0_40] : memref<36x128xbf16, #tpu.memory_space<vmem>>, vector<36x128xbf16>
    %cst_41 = arith.constant dense<0.000000e+00> : vector<128x128xf32>
    %57 = tpu.matmul %55, %56, %cst_41 {dimension_numbers = #tpu.dot_dimension_numbers<[1], [0], [0], [1], [0, 0, 1, 1], [], []>} : vector<128x36xbf16>, vector<36x128xbf16>, vector<128x128xf32> -> vector<128x128xf32>
    %c1_42 = arith.constant 1 : index
    %c0_43 = arith.constant 0 : index
    %c0_44 = arith.constant 0 : index
    %58 = vector.load %arg2[%c1_42, %c0_43, %c0_44] : memref<2x1x128xf32, #tpu.memory_space<vmem>>, vector<1x1x128xf32>
    %59 = vector.shape_cast %58 : vector<1x1x128xf32> to vector<1x128xf32>
    %60 = vector.broadcast %59 : vector<1x128xf32> to vector<128x128xf32>
    %61 = arith.addf %57, %60 : vector<128x128xf32>
    %cst_45 = arith.constant 0.000000e+00 : f32
    %62 = vector.broadcast %cst_45 : f32 to vector<128x128xf32>
    %63 = arith.maximumf %61, %62 : vector<128x128xf32>
    %64 = arith.truncf %63 : vector<128x128xf32> to vector<128x128xbf16>
    %c0_46 = arith.constant 0 : index
    %c0_47 = arith.constant 0 : index
    %c0_48 = arith.constant 0 : index
    %65 = vector.load %arg5[%c0_46, %c0_47, %c0_48] : memref<3x128x128xbf16, #tpu.memory_space<vmem>>, vector<1x128x128xbf16>
    %66 = vector.shape_cast %65 : vector<1x128x128xbf16> to vector<128x128xbf16>
    %cst_49 = arith.constant dense<0.000000e+00> : vector<128x128xf32>
    %67 = tpu.matmul %64, %66, %cst_49 {dimension_numbers = #tpu.dot_dimension_numbers<[1], [0], [0], [1], [0, 0, 1, 1], [], []>} : vector<128x128xbf16>, vector<128x128xbf16>, vector<128x128xf32> -> vector<128x128xf32>
    %c0_50 = arith.constant 0 : index
    %c0_51 = arith.constant 0 : index
    %c0_52 = arith.constant 0 : index
    %68 = vector.load %arg6[%c0_50, %c0_51, %c0_52] : memref<3x1x128xf32, #tpu.memory_space<vmem>>, vector<1x1x128xf32>
    %69 = vector.shape_cast %68 : vector<1x1x128xf32> to vector<1x128xf32>
    %70 = vector.broadcast %69 : vector<1x128xf32> to vector<128x128xf32>
    %71 = arith.addf %67, %70 : vector<128x128xf32>
    %cst_53 = arith.constant 0.000000e+00 : f32
    %72 = vector.broadcast %cst_53 : f32 to vector<128x128xf32>
    %73 = arith.maximumf %71, %72 : vector<128x128xf32>
    %74 = arith.truncf %73 : vector<128x128xf32> to vector<128x128xbf16>
    %c1_54 = arith.constant 1 : index
    %c0_55 = arith.constant 0 : index
    %c0_56 = arith.constant 0 : index
    %75 = vector.load %arg5[%c1_54, %c0_55, %c0_56] : memref<3x128x128xbf16, #tpu.memory_space<vmem>>, vector<1x128x128xbf16>
    %76 = vector.shape_cast %75 : vector<1x128x128xbf16> to vector<128x128xbf16>
    %cst_57 = arith.constant dense<0.000000e+00> : vector<128x128xf32>
    %77 = tpu.matmul %74, %76, %cst_57 {dimension_numbers = #tpu.dot_dimension_numbers<[1], [0], [0], [1], [0, 0, 1, 1], [], []>} : vector<128x128xbf16>, vector<128x128xbf16>, vector<128x128xf32> -> vector<128x128xf32>
    %c1_58 = arith.constant 1 : index
    %c0_59 = arith.constant 0 : index
    %c0_60 = arith.constant 0 : index
    %78 = vector.load %arg6[%c1_58, %c0_59, %c0_60] : memref<3x1x128xf32, #tpu.memory_space<vmem>>, vector<1x1x128xf32>
    %79 = vector.shape_cast %78 : vector<1x1x128xf32> to vector<1x128xf32>
    %80 = vector.broadcast %79 : vector<1x128xf32> to vector<128x128xf32>
    %81 = arith.addf %77, %80 : vector<128x128xf32>
    %cst_61 = arith.constant 0.000000e+00 : f32
    %82 = vector.broadcast %cst_61 : f32 to vector<128x128xf32>
    %83 = arith.maximumf %81, %82 : vector<128x128xf32>
    %84 = arith.truncf %83 : vector<128x128xf32> to vector<128x128xbf16>
    %c2_62 = arith.constant 2 : index
    %c0_63 = arith.constant 0 : index
    %c0_64 = arith.constant 0 : index
    %85 = vector.load %arg5[%c2_62, %c0_63, %c0_64] : memref<3x128x128xbf16, #tpu.memory_space<vmem>>, vector<1x128x128xbf16>
    %86 = vector.shape_cast %85 : vector<1x128x128xbf16> to vector<128x128xbf16>
    %cst_65 = arith.constant dense<0.000000e+00> : vector<128x128xf32>
    %87 = tpu.matmul %84, %86, %cst_65 {dimension_numbers = #tpu.dot_dimension_numbers<[1], [0], [0], [1], [0, 0, 1, 1], [], []>} : vector<128x128xbf16>, vector<128x128xbf16>, vector<128x128xf32> -> vector<128x128xf32>
    %c2_66 = arith.constant 2 : index
    %c0_67 = arith.constant 0 : index
    %c0_68 = arith.constant 0 : index
    %88 = vector.load %arg6[%c2_66, %c0_67, %c0_68] : memref<3x1x128xf32, #tpu.memory_space<vmem>>, vector<1x1x128xf32>
    %89 = vector.shape_cast %88 : vector<1x1x128xf32> to vector<1x128xf32>
    %90 = vector.broadcast %89 : vector<1x128xf32> to vector<128x128xf32>
    %91 = arith.addf %87, %90 : vector<128x128xf32>
    %cst_69 = arith.constant 0.000000e+00 : f32
    %92 = vector.broadcast %cst_69 : f32 to vector<128x128xf32>
    %93 = arith.maximumf %91, %92 : vector<128x128xf32>
    %94 = arith.truncf %93 : vector<128x128xf32> to vector<128x128xbf16>
    %95 = arith.extf %94 : vector<128x128xbf16> to vector<128x128xf32>
    %c0_70 = arith.constant 0 : index
    %c0_71 = arith.constant 0 : index
    %96 = vector.load %arg7[%c0_70, %c0_71] : memref<1x128xf32, #tpu.memory_space<vmem>>, vector<1x128xf32>
    %97 = vector.broadcast %96 : vector<1x128xf32> to vector<128x128xf32>
    %98 = arith.mulf %95, %97 : vector<128x128xf32>
    %cst_72 = arith.constant dense<0.000000e+00> : vector<128xf32>
    %99 = vector.multi_reduction <add>, %98, %cst_72 [1] : vector<128x128xf32> to vector<128xf32>
    %100 = vector.broadcast %0 : f32 to vector<128xf32>
    %101 = arith.addf %99, %100 : vector<128xf32>
    %c1_73 = arith.constant 1 : index
    %c0_74 = arith.constant 0 : index
    %102 = vector.load %arg8[%c1_73, %c0_74] : memref<2x128xf32, #tpu.memory_space<vmem>>, vector<1x128xf32>
    %103 = vector.shape_cast %102 : vector<1x128xf32> to vector<128xf32>
    %104 = vector.shape_cast %101 : vector<128xf32> to vector<1x128xf32>
    tpu.vector_store %arg8[%c1_73, %c0_74], %104 {strides = array<i32>} : memref<2x128xf32, #tpu.memory_space<vmem>>, vector<1x128xf32>,
    return
  }
  func.func @transform_0(%arg0: i32) -> i32 {
    %c0_i32 = arith.constant 0 : i32
    %c0_i32_0 = arith.constant 0 : i32
    return %c0_i32 : i32
  }
  func.func @transform_1(%arg0: i32) -> (i32, i32, i32) {
    %c0_i32 = arith.constant 0 : i32
    %c0_i32_0 = arith.constant 0 : i32
    %c0_i32_1 = arith.constant 0 : i32
    %c0_i32_2 = arith.constant 0 : i32
    return %c0_i32, %c0_i32_0, %c0_i32_1 : i32, i32, i32
  }
  func.func @transform_2(%arg0: i32) -> (i32, i32, i32) {
    %c0_i32 = arith.constant 0 : i32
    %c0_i32_0 = arith.constant 0 : i32
    %c0_i32_1 = arith.constant 0 : i32
    return %c0_i32, %arg0, %c0_i32_0 : i32, i32, i32
  }
  func.func @transform_3(%arg0: i32) -> (i32, i32) {
    %c0_i32 = arith.constant 0 : i32
    %c0_i32_0 = arith.constant 0 : i32
    %c0_i32_1 = arith.constant 0 : i32
    return %c0_i32, %c0_i32_0 : i32, i32
  }
  func.func @transform_4(%arg0: i32) -> (i32, i32, i32) {
    %c0_i32 = arith.constant 0 : i32
    %c0_i32_0 = arith.constant 0 : i32
    %c0_i32_1 = arith.constant 0 : i32
    %c0_i32_2 = arith.constant 0 : i32
    return %c0_i32, %c0_i32_0, %c0_i32_1 : i32, i32, i32
  }
  func.func @transform_5(%arg0: i32) -> (i32, i32, i32) {
    %c0_i32 = arith.constant 0 : i32
    %c0_i32_0 = arith.constant 0 : i32
    %c0_i32_1 = arith.constant 0 : i32
    %c0_i32_2 = arith.constant 0 : i32
    return %c0_i32, %c0_i32_0, %c0_i32_1 : i32, i32, i32
  }
  func.func @transform_6(%arg0: i32) -> (i32, i32) {
    %c0_i32 = arith.constant 0 : i32
    %c0_i32_0 = arith.constant 0 : i32
    %c0_i32_1 = arith.constant 0 : i32
    return %c0_i32, %c0_i32_0 : i32, i32
  }
  func.func @transform_7(%arg0: i32) -> (i32, i32) {
    %c0_i32 = arith.constant 0 : i32
    %c0_i32_0 = arith.constant 0 : i32
    return %c0_i32, %arg0 : i32, i32
  }
}

</mosaic_0001>

<llo_original>
// kernel: tpu_custom_call.1
$region0: #{tpu_custom_call.1}
  #allocation0 [shape = 'u32[]', space=smem, size = 0x4, offset = 0x4, fixed_abs, tag = 'smem constant byte address 0x4 - core index']
  #allocation1 [shape = 'u32[144,128]{1,0:T(1,128)}', space=vmem, size = 0x12000, scoped, tag = 'internal scratch']
  #allocation2 [shape = 'f32[1]{0:T(128)S(6)}', space=smem, size = 0x200, scoped, tag = 'scoped memory for tpu_custom_call.1']
  %s0 = inlined_call_operand.<no memory space> [shape: f32[1], index: 0, kind: input, shape index: {}]
  %s1 = inlined_call_operand.vmem [shape: f32[2,1,128], index: 1, kind: input, shape index: {}]
  %s2 = inlined_call_operand.vmem [shape: f32[2,128,36], index: 2, kind: input, shape index: {}]
  %s3 = inlined_call_operand.vmem [shape: bf16[36,128], index: 3, kind: input, shape index: {}]
  %s4 = inlined_call_operand.vmem [shape: bf16[3,128,128], index: 4, kind: input, shape index: {}]
  %s5 = inlined_call_operand.vmem [shape: f32[3,1,128], index: 5, kind: input, shape index: {}]
  %s6 = inlined_call_operand.vmem [shape: f32[1,128], index: 6, kind: input, shape index: {}]
  %s7 = inlined_call_operand.hbm [shape: f32[2,128], index: 7, kind: output, shape index: {}]
  %s8 = sld [smem:[#allocation0]]
  $region38: #{tpu_custom_call.1} parent=0
    _
  %s10 = ssub.s32 1, %s8
  %s11 = scalar_select 0, %s10, %s8
  %12 = sst [smem:[#allocation2]] %s0
  $region1: #{tpu_custom_call.1} parent=0
    #allocation3 [shape = 'u8[1024]{0}', space=vmem, size = 0x400, scoped, tag = 'output window, operand 0, single buffered']
    #allocation4 [shape = 's32[1]{0}', space=sflag, size = 0x4, scoped, tag = 'scoped memory for tpu_custom_call.1']
    %13 = vsyncpa [#allocation4], 0
    // Predicated region
    $region2: #{tpu_custom_call.1} parent=1 // pred_check
      _
    $region3: #{tpu_custom_call.1} parent=1 // pred_check_branch
      %15 = sbr.rel (0) target = $region5
    $region4: #{tpu_custom_call.1} parent=1 // pred_region
      _
    $region5: #{tpu_custom_call.1} parent=1 // pred_fallthru
      _
    // Predicated region
    $region6: #{tpu_custom_call.1} parent=1 // pred_check
      _
    $region7: #{tpu_custom_call.1} parent=1 // pred_check_branch
      %17 = sbr.rel (0) target = $region9
    $region8: #{tpu_custom_call.1} parent=1 // pred_region
      _
    $region9: #{tpu_custom_call.1} parent=1 // pred_fallthru
      _
    // Predicated region
    $region10: #{tpu_custom_call.1} parent=1 // pred_check
      _
    $region11: #{tpu_custom_call.1} parent=1 // pred_check_branch
      %19 = sbr.rel (0) target = $region13
    $region12: #{tpu_custom_call.1} parent=1 // pred_region
      _
    $region13: #{tpu_custom_call.1} parent=1 // pred_fallthru
      _
    // Predicated region
    $region14: #{tpu_custom_call.1} parent=1 // pred_check
      _
    $region15: #{tpu_custom_call.1} parent=1 // pred_check_branch
      %21 = sbr.rel (0) target = $region17
    $region16: #{tpu_custom_call.1} parent=1 // pred_region
      _
    $region17: #{tpu_custom_call.1} parent=1 // pred_fallthru
      _
    // Predicated region
    $region18: #{tpu_custom_call.1} parent=1 // pred_check
      _
    $region19: #{tpu_custom_call.1} parent=1 // pred_check_branch
      %23 = sbr.rel (0) target = $region21
    $region20: #{tpu_custom_call.1} parent=1 // pred_region
      _
    $region21: #{tpu_custom_call.1} parent=1 // pred_fallthru
      _
    // Predicated region
    $region22: #{tpu_custom_call.1} parent=1 // pred_check
      _
    $region23: #{tpu_custom_call.1} parent=1 // pred_check_branch
      %25 = sbr.rel (0) target = $region25
    $region24: #{tpu_custom_call.1} parent=1 // pred_region
      _
    $region25: #{tpu_custom_call.1} parent=1 // pred_fallthru
      _
    // Predicated region
    $region26: #{tpu_custom_call.1} parent=1 // pred_check
      _
    $region27: #{tpu_custom_call.1} parent=1 // pred_check_branch
      %27 = sbr.rel (0) target = $region29
    $region28: #{tpu_custom_call.1} parent=1 // pred_region
      _
    $region29: #{tpu_custom_call.1} parent=1 // pred_fallthru
      _
    %s29 = sld [smem:[#allocation2]]
    %v30 = vld [vmem:[%s2] sm:$0xff]
    %v31 = vld [vmem:[%s2 + $0x8] sm:$0xff]
    %v32 = vld [vmem:[%s2 + $0x10] sm:$0xff]
    %v33 = vld [vmem:[%s2 + $0x18] sm:$0xff]
    %v34 = vld [vmem:[%s2 + $0x20] sm:$0xff]
    %v35 = vld [vmem:[%s2 + $0x28] sm:$0xff]
    %v36 = vld [vmem:[%s2 + $0x30] sm:$0xff]
    %v37 = vld [vmem:[%s2 + $0x38] sm:$0xff]
    %v38 = vld [vmem:[%s2 + $0x40] sm:$0xff]
    %v39 = vld [vmem:[%s2 + $0x48] sm:$0xff]
    %v40 = vld [vmem:[%s2 + $0x50] sm:$0xff]
    %v41 = vld [vmem:[%s2 + $0x58] sm:$0xff]
    %v42 = vld [vmem:[%s2 + $0x60] sm:$0xff]
    %v43 = vld [vmem:[%s2 + $0x68] sm:$0xff]
    %v44 = vld [vmem:[%s2 + $0x70] sm:$0xff]
    %v45 = vld [vmem:[%s2 + $0x78] sm:$0xff]
    %v46 = vpack.c.bf16 %v31, %v30
    %v47 = vpack.c.bf16 %v33, %v32
    %v48 = vpack.c.bf16 %v35, %v34
    %v49 = vpack.c.bf16 %v37, %v36
    %v50 = vpack.c.bf16 %v39, %v38
    %v51 = vpack.c.bf16 %v41, %v40
    %v52 = vpack.c.bf16 %v43, %v42
    %v53 = vpack.c.bf16 %v45, %v44
    %v54 = vld [vmem:[%s3] sm:$0xf]
    %v55 = vld [vmem:[%s3 + $0x4] sm:$0xf]
    %v56 = vld [vmem:[%s3 + $0x8] sm:$0xf]
    %v57 = vld [vmem:[%s3 + $0xc] sm:$0xf]
    %v58 = vld [vmem:[%s3 + $0x10] sm:$0x3]
    %v59 = vld [vmem:[%s1] sm:$0x1]
    %v61 = vlaneseq
    %v62 = vshrl.u32 %v61, 7
    %v63 = vsub.s32 0, %v62
    %v64 = vrot.slane %v59, %v63
    %v71 = vunpack.c.l.b16 %v54
    %v72 = vunpack.c.l.b16 %v55
    %v73 = vunpack.c.l.b16 %v56
    %v74 = vunpack.c.l.b16 %v57
    %v75 = vunpack.c.l.b16 %v58
    %v76 = vpack.c.b16 %v72, %v71
    %v77 = vpack.c.b16 %v74, %v73
    %v78 = vpack.c.b16 %v75, %v75
    %vm81 = vcmask 293888
    %v83 = vsel %vm81, %v46, 0
    %v86 = vsel %vm81, %v47, 0
    %v89 = vsel %vm81, %v48, 0
    %v92 = vsel %vm81, %v49, 0
    %v95 = vsel %vm81, %v50, 0
    %v98 = vsel %vm81, %v51, 0
    %v101 = vsel %vm81, %v52, 0
    %v104 = vsel %vm81, %v53, 0
    %vm106 = vcmask 1041408
    %v108 = vsel %vm106, %v78, 0
    %110 = vmatprep.subr.bf16.mxu0 0
    %111 = vmatpush1.bf16.msra.mxu0 %v76
    %112 = vmatprep.subr.bf16.mxu0 0
    %113 = vmatpush1.bf16.msra.mxu0 %v77
    %114 = vmatprep.subr.bf16.mxu0 0
    %115 = vmatpush1.bf16.msra.mxu0 %v108
    %116 = vmatprep.subr.bf16.mxu0 0
    %117 = vmatpush1.bf16.msra.mxu0 0
    %118 = vmatprep.subr.bf16.mxu0 0
    %119 = vmatpush1.bf16.msra.mxu0 0
    %120 = vmatprep.subr.bf16.mxu0 0
    %121 = vmatpush1.bf16.msra.mxu0 0
    %122 = vmatprep.subr.bf16.mxu0 0
    %123 = vmatpush1.bf16.msra.mxu0 0
    %124 = vmatprep.subr.bf16.mxu0 0
    %125 = vmatpush1.bf16.msra.mxu0 0
    %126 = vmatprep.subr.bf16.mxu0 0
    %127 = vmatpush1.bf16.msra.mxu0 0
    %128 = vmatprep.subr.bf16.mxu0 0
    %129 = vmatpush1.bf16.msra.mxu0 0
    %130 = vmatprep.subr.bf16.mxu0 0
    %131 = vmatpush1.bf16.msra.mxu0 0
    %132 = vmatprep.subr.bf16.mxu0 0
    %133 = vmatpush1.bf16.msra.mxu0 0
    %134 = vmatprep.subr.bf16.mxu0 0
    %135 = vmatpush1.bf16.msra.mxu0 0
    %136 = vmatprep.subr.bf16.mxu0 0
    %137 = vmatpush1.bf16.msra.mxu0 0
    %138 = vmatprep.subr.bf16.mxu0 0
    %139 = vmatpush1.bf16.msra.mxu0 0
    %140 = vmatprep.subr.bf16.mxu0 0
    %141 = vmatpush1.bf16.msra.mxu0 0
    %142 = vmatprep.mubr.bf16.mxu0 0
    %143 = vmatmul.mubr.bf16.gmra.mrb[0].mxu0 %v83
    %v144 = vpop.f32.mrb[0].mxu0
    %v145 = vadd.f32 %v64, %v144
    %v146 = vpop.f32.mrb[0].mxu0
    %v147 = vpop.f32.mrb[0].mxu0
    %v148 = vadd.f32 %v64, %v147
    %v149 = vpop.f32.mrb[0].mxu0
    %150 = vmatprep.mubr.bf16.mxu0 0
    %151 = vmatmul.mubr.bf16.gmra.mrb[0].mxu0 %v86
    %v152 = vpop.f32.mrb[0].mxu0
    %v153 = vadd.f32 %v64, %v152
    %v154 = vpop.f32.mrb[0].mxu0
    %v155 = vpop.f32.mrb[0].mxu0
    %v156 = vadd.f32 %v64, %v155
    %v157 = vpop.f32.mrb[0].mxu0
    %158 = vmatprep.mubr.bf16.mxu0 0
    %159 = vmatmul.mubr.bf16.gmra.mrb[0].mxu0 %v89
    %v160 = vpop.f32.mrb[0].mxu0
    %v161 = vadd.f32 %v64, %v160
    %v162 = vpop.f32.mrb[0].mxu0
    %v163 = vpop.f32.mrb[0].mxu0
    %v164 = vadd.f32 %v64, %v163
    %v165 = vpop.f32.mrb[0].mxu0
    %166 = vmatprep.mubr.bf16.mxu0 0
    %167 = vmatmul.mubr.bf16.gmra.mrb[0].mxu0 %v92
    %v168 = vpop.f32.mrb[0].mxu0
    %v169 = vadd.f32 %v64, %v168
    %v170 = vpop.f32.mrb[0].mxu0
    %v171 = vpop.f32.mrb[0].mxu0
    %v172 = vadd.f32 %v64, %v171
    %v173 = vpop.f32.mrb[0].mxu0
    %174 = vmatprep.mubr.bf16.mxu0 0
    %175 = vmatmul.mubr.bf16.gmra.mrb[0].mxu0 %v95
    %v176 = vpop.f32.mrb[0].mxu0
    %v177 = vadd.f32 %v64, %v176
    %v178 = vpop.f32.mrb[0].mxu0
    %v179 = vpop.f32.mrb[0].mxu0
    %v180 = vadd.f32 %v64, %v179
    %v181 = vpop.f32.mrb[0].mxu0
    %182 = vmatprep.mubr.bf16.mxu0 0
    %183 = vmatmul.mubr.bf16.gmra.mrb[0].mxu0 %v98
    %v184 = vpop.f32.mrb[0].mxu0
    %v185 = vadd.f32 %v64, %v184
    %v186 = vpop.f32.mrb[0].mxu0
    %v187 = vpop.f32.mrb[0].mxu0
    %v188 = vadd.f32 %v64, %v187
    %v189 = vpop.f32.mrb[0].mxu0
    %190 = vmatprep.mubr.bf16.mxu0 0
    %191 = vmatmul.mubr.bf16.gmra.mrb[0].mxu0 %v101
    %v192 = vpop.f32.mrb[0].mxu0
    %v193 = vadd.f32 %v64, %v192
    %v194 = vpop.f32.mrb[0].mxu0
    %v195 = vpop.f32.mrb[0].mxu0
    %v196 = vadd.f32 %v64, %v195
    %v197 = vpop.f32.mrb[0].mxu0
    %198 = vmatprep.mubr.bf16.mxu0 0
    %199 = vmatmul.mubr.bf16.gmra.mrb[0].mxu0 %v104
    %v200 = vpop.f32.mrb[0].mxu0
    %v201 = vadd.f32 %v64, %v200
    %v202 = vpop.f32.mrb[0].mxu0
    %v203 = vpop.f32.mrb[0].mxu0
    %v204 = vadd.f32 %v64, %v203
    %v205 = vpop.f32.mrb[0].mxu0
    %206 = vdwg.mxu0
    %v207 = vmax.f32 %v145, 0.0
    %v208 = vmax.f32 %v148, 0.0
    %v209 = vmax.f32 %v153, 0.0
    %v210 = vmax.f32 %v156, 0.0
    %v211 = vmax.f32 %v161, 0.0
    %v212 = vmax.f32 %v164, 0.0
    %v213 = vmax.f32 %v169, 0.0
    %v214 = vmax.f32 %v172, 0.0
    %v215 = vmax.f32 %v177, 0.0
    %v216 = vmax.f32 %v180, 0.0
    %v217 = vmax.f32 %v185, 0.0
    %v218 = vmax.f32 %v188, 0.0
    %v219 = vmax.f32 %v193, 0.0
    %v220 = vmax.f32 %v196, 0.0
    %v221 = vmax.f32 %v201, 0.0
    %v222 = vmax.f32 %v204, 0.0
    %v223 = vpack.c.bf16 %v208, %v207
    %v224 = vpack.c.bf16 %v210, %v209
    %v225 = vpack.c.bf16 %v212, %v211
    %v226 = vpack.c.bf16 %v214, %v213
    %v227 = vpack.c.bf16 %v216, %v215
    %v228 = vpack.c.bf16 %v218, %v217
    %v229 = vpack.c.bf16 %v220, %v219
    %v230 = vpack.c.bf16 %v222, %v221
    %v231 = vld [vmem:[%s4] sm:$0xf]
    %v232 = vld [vmem:[%s4 + $0x4] sm:$0xf]
    %v233 = vld [vmem:[%s4 + $0x8] sm:$0xf]
    %v234 = vld [vmem:[%s4 + $0xc] sm:$0xf]
    %v235 = vld [vmem:[%s4 + $0x10] sm:$0xf]
    %v236 = vld [vmem:[%s4 + $0x14] sm:$0xf]
    %v237 = vld [vmem:[%s4 + $0x18] sm:$0xf]
    %v238 = vld [vmem:[%s4 + $0x1c] sm:$0xf]
    %v239 = vld [vmem:[%s4 + $0x20] sm:$0xf]
    %v240 = vld [vmem:[%s4 + $0x24] sm:$0xf]
    %v241 = vld [vmem:[%s4 + $0x28] sm:$0xf]
    %v242 = vld [vmem:[%s4 + $0x2c] sm:$0xf]
    %v243 = vld [vmem:[%s4 + $0x30] sm:$0xf]
    %v244 = vld [vmem:[%s4 + $0x34] sm:$0xf]
    %v245 = vld [vmem:[%s4 + $0x38] sm:$0xf]
    %v246 = vld [vmem:[%s4 + $0x3c] sm:$0xf]
    %v247 = vld [vmem:[%s5] sm:$0x1]
    %v249 = vlaneseq
    %v250 = vshrl.u32 %v249, 7
    %v251 = vsub.s32 0, %v250
    %v252 = vrot.slane %v247, %v251
    %v270 = vunpack.c.l.b16 %v231
    %v271 = vunpack.c.l.b16 %v232
    %v272 = vunpack.c.l.b16 %v233
    %v273 = vunpack.c.l.b16 %v234
    %v274 = vunpack.c.l.b16 %v235
    %v275 = vunpack.c.l.b16 %v236
    %v276 = vunpack.c.l.b16 %v237
    %v277 = vunpack.c.l.b16 %v238
    %v278 = vunpack.c.l.b16 %v239
    %v279 = vunpack.c.l.b16 %v240
    %v280 = vunpack.c.l.b16 %v241
    %v281 = vunpack.c.l.b16 %v242
    %v282 = vunpack.c.l.b16 %v243
    %v283 = vunpack.c.l.b16 %v244
    %v284 = vunpack.c.l.b16 %v245
    %v285 = vunpack.c.l.b16 %v246
    %v286 = vpack.c.b16 %v271, %v270
    %v287 = vpack.c.b16 %v273, %v272
    %v288 = vpack.c.b16 %v275, %v274
    %v289 = vpack.c.b16 %v277, %v276
    %v290 = vpack.c.b16 %v279, %v278
    %v291 = vpack.c.b16 %v281, %v280
    %v292 = vpack.c.b16 %v283, %v282
    %v293 = vpack.c.b16 %v285, %v284
    %302 = vmatprep.subr.bf16.mxu0 0
    %303 = vmatpush1.bf16.msra.mxu0 %v286
    %304 = vmatprep.subr.bf16.mxu0 0
    %305 = vmatpush1.bf16.msra.mxu0 %v287
    %306 = vmatprep.subr.bf16.mxu0 0
    %307 = vmatpush1.bf16.msra.mxu0 %v288
    %308 = vmatprep.subr.bf16.mxu0 0
    %309 = vmatpush1.bf16.msra.mxu0 %v289
    %310 = vmatprep.subr.bf16.mxu0 0
    %311 = vmatpush1.bf16.msra.mxu0 %v290
    %312 = vmatprep.subr.bf16.mxu0 0
    %313 = vmatpush1.bf16.msra.mxu0 %v291
    %314 = vmatprep.subr.bf16.mxu0 0
    %315 = vmatpush1.bf16.msra.mxu0 %v292
    %316 = vmatprep.subr.bf16.mxu0 0
    %317 = vmatpush1.bf16.msra.mxu0 %v293
    %318 = vmatprep.subr.bf16.mxu0 0
    %319 = vmatpush1.bf16.msra.mxu0 0
    %320 = vmatprep.subr.bf16.mxu0 0
    %321 = vmatpush1.bf16.msra.mxu0 0
    %322 = vmatprep.subr.bf16.mxu0 0
    %323 = vmatpush1.bf16.msra.mxu0 0
    %324 = vmatprep.subr.bf16.mxu0 0
    %325 = vmatpush1.bf16.msra.mxu0 0
    %326 = vmatprep.subr.bf16.mxu0 0
    %327 = vmatpush1.bf16.msra.mxu0 0
    %328 = vmatprep.subr.bf16.mxu0 0
    %329 = vmatpush1.bf16.msra.mxu0 0
    %330 = vmatprep.subr.bf16.mxu0 0
    %331 = vmatpush1.bf16.msra.mxu0 0
    %332 = vmatprep.subr.bf16.mxu0 0
    %333 = vmatpush1.bf16.msra.mxu0 0
    %334 = vmatprep.mubr.bf16.mxu0 0
    %335 = vmatmul.mubr.bf16.gmra.mrb[0].mxu0 %v223
    %v336 = vpop.f32.mrb[0].mxu0
    %v337 = vadd.f32 %v252, %v336
    %v338 = vpop.f32.mrb[0].mxu0
    %v339 = vpop.f32.mrb[0].mxu0
    %v340 = vadd.f32 %v252, %v339
    %v341 = vpop.f32.mrb[0].mxu0
    %342 = vmatprep.mubr.bf16.mxu0 0
    %343 = vmatmul.mubr.bf16.gmra.mrb[0].mxu0 %v224
    %v344 = vpop.f32.mrb[0].mxu0
    %v345 = vadd.f32 %v252, %v344
    %v346 = vpop.f32.mrb[0].mxu0
    %v347 = vpop.f32.mrb[0].mxu0
    %v348 = vadd.f32 %v252, %v347
    %v349 = vpop.f32.mrb[0].mxu0
    %350 = vmatprep.mubr.bf16.mxu0 0
    %351 = vmatmul.mubr.bf16.gmra.mrb[0].mxu0 %v225
    %v352 = vpop.f32.mrb[0].mxu0
    %v353 = vadd.f32 %v252, %v352
    %v354 = vpop.f32.mrb[0].mxu0
    %v355 = vpop.f32.mrb[0].mxu0
    %v356 = vadd.f32 %v252, %v355
    %v357 = vpop.f32.mrb[0].mxu0
    %358 = vmatprep.mubr.bf16.mxu0 0
    %359 = vmatmul.mubr.bf16.gmra.mrb[0].mxu0 %v226
    %v360 = vpop.f32.mrb[0].mxu0
    %v361 = vadd.f32 %v252, %v360
    %v362 = vpop.f32.mrb[0].mxu0
    %v363 = vpop.f32.mrb[0].mxu0
    %v364 = vadd.f32 %v252, %v363
    %v365 = vpop.f32.mrb[0].mxu0
    %366 = vmatprep.mubr.bf16.mxu0 0
    %367 = vmatmul.mubr.bf16.gmra.mrb[0].mxu0 %v227
    %v368 = vpop.f32.mrb[0].mxu0
    %v369 = vadd.f32 %v252, %v368
    %v370 = vpop.f32.mrb[0].mxu0
    %v371 = vpop.f32.mrb[0].mxu0
    %v372 = vadd.f32 %v252, %v371
    %v373 = vpop.f32.mrb[0].mxu0
    %374 = vmatprep.mubr.bf16.mxu0 0
    %375 = vmatmul.mubr.bf16.gmra.mrb[0].mxu0 %v228
    %v376 = vpop.f32.mrb[0].mxu0
    %v377 = vadd.f32 %v252, %v376
    %v378 = vpop.f32.mrb[0].mxu0
    %v379 = vpop.f32.mrb[0].mxu0
    %v380 = vadd.f32 %v252, %v379
    %v381 = vpop.f32.mrb[0].mxu0
    %382 = vmatprep.mubr.bf16.mxu0 0
    %383 = vmatmul.mubr.bf16.gmra.mrb[0].mxu0 %v229
    %v384 = vpop.f32.mrb[0].mxu0
    %v385 = vadd.f32 %v252, %v384
    %v386 = vpop.f32.mrb[0].mxu0
    %v387 = vpop.f32.mrb[0].mxu0
    %v388 = vadd.f32 %v252, %v387
    %v389 = vpop.f32.mrb[0].mxu0
    %390 = vmatprep.mubr.bf16.mxu0 0
    %391 = vmatmul.mubr.bf16.gmra.mrb[0].mxu0 %v230
    %v392 = vpop.f32.mrb[0].mxu0
    %v393 = vadd.f32 %v252, %v392
    %v394 = vpop.f32.mrb[0].mxu0
    %v395 = vpop.f32.mrb[0].mxu0
    %v396 = vadd.f32 %v252, %v395
    %v397 = vpop.f32.mrb[0].mxu0
    %398 = vdwg.mxu0
    %v399 = vmax.f32 %v337, 0.0
    %v400 = vmax.f32 %v340, 0.0
    %v401 = vmax.f32 %v345, 0.0
    %v402 = vmax.f32 %v348, 0.0
    %v403 = vmax.f32 %v353, 0.0
    %v404 = vmax.f32 %v356, 0.0
    %v405 = vmax.f32 %v361, 0.0
    %v406 = vmax.f32 %v364, 0.0
    %v407 = vmax.f32 %v369, 0.0
    %v408 = vmax.f32 %v372, 0.0
    %v409 = vmax.f32 %v377, 0.0
    %v410 = vmax.f32 %v380, 0.0
    %v411 = vmax.f32 %v385, 0.0
    %v412 = vmax.f32 %v388, 0.0
    %v413 = vmax.f32 %v393, 0.0
    %v414 = vmax.f32 %v396, 0.0
    %v415 = vpack.c.bf16 %v400, %v399
    %v416 = vpack.c.bf16 %v402, %v401
    %v417 = vpack.c.bf16 %v404, %v403
    %v418 = vpack.c.bf16 %v406, %v405
    %v419 = vpack.c.bf16 %v408, %v407
    %v420 = vpack.c.bf16 %v410, %v409
    %v421 = vpack.c.bf16 %v412, %v411
    %v422 = vpack.c.bf16 %v414, %v413
    %s423 = scalar_lea.vmem %s4, 64
    %v424 = vld [vmem:[%s423] sm:$0xf]
    %v425 = vld [vmem:[%s423 + $0x4] sm:$0xf]
    %v426 = vld [vmem:[%s423 + $0x8] sm:$0xf]
    %v427 = vld [vmem:[%s423 + $0xc] sm:$0xf]
    %v428 = vld [vmem:[%s423 + $0x10] sm:$0xf]
    %v429 = vld [vmem:[%s423 + $0x14] sm:$0xf]
    %v430 = vld [vmem:[%s423 + $0x18] sm:$0xf]
    %v431 = vld [vmem:[%s423 + $0x1c] sm:$0xf]
    %v432 = vld [vmem:[%s423 + $0x20] sm:$0xf]
    %v433 = vld [vmem:[%s423 + $0x24] sm:$0xf]
    %v434 = vld [vmem:[%s423 + $0x28] sm:$0xf]
    %v435 = vld [vmem:[%s423 + $0x2c] sm:$0xf]
    %v436 = vld [vmem:[%s423 + $0x30] sm:$0xf]
    %v437 = vld [vmem:[%s423 + $0x34] sm:$0xf]
    %v438 = vld [vmem:[%s423 + $0x38] sm:$0xf]
    %v439 = vld [vmem:[%s423 + $0x3c] sm:$0xf]
    %s440 = scalar_lea.vmem %s5, 1
    %v441 = vld [vmem:[%s440] sm:$0x1]
    %v443 = vlaneseq
    %v444 = vshrl.u32 %v443, 7
    %v445 = vsub.s32 0, %v444
    %v446 = vrot.slane %v441, %v445
    %v464 = vunpack.c.l.b16 %v424
    %v465 = vunpack.c.l.b16 %v425
    %v466 = vunpack.c.l.b16 %v426
    %v467 = vunpack.c.l.b16 %v427
    %v468 = vunpack.c.l.b16 %v428
    %v469 = vunpack.c.l.b16 %v429
    %v470 = vunpack.c.l.b16 %v430
    %v471 = vunpack.c.l.b16 %v431
    %v472 = vunpack.c.l.b16 %v432
    %v473 = vunpack.c.l.b16 %v433
    %v474 = vunpack.c.l.b16 %v434
    %v475 = vunpack.c.l.b16 %v435
    %v476 = vunpack.c.l.b16 %v436
    %v477 = vunpack.c.l.b16 %v437
    %v478 = vunpack.c.l.b16 %v438
    %v479 = vunpack.c.l.b16 %v439
    %v480 = vpack.c.b16 %v465, %v464
    %v481 = vpack.c.b16 %v467, %v466
    %v482 = vpack.c.b16 %v469, %v468
    %v483 = vpack.c.b16 %v471, %v470
    %v484 = vpack.c.b16 %v473, %v472
    %v485 = vpack.c.b16 %v475, %v474
    %v486 = vpack.c.b16 %v477, %v476
    %v487 = vpack.c.b16 %v479, %v478
    %496 = vmatprep.subr.bf16.mxu0 0
    %497 = vmatpush1.bf16.msra.mxu0 %v480
    %498 = vmatprep.subr.bf16.mxu0 0
    %499 = vmatpush1.bf16.msra.mxu0 %v481
    %500 = vmatprep.subr.bf16.mxu0 0
    %501 = vmatpush1.bf16.msra.mxu0 %v482
    %502 = vmatprep.subr.bf16.mxu0 0
    %503 = vmatpush1.bf16.msra.mxu0 %v483
    %504 = vmatprep.subr.bf16.mxu0 0
    %505 = vmatpush1.bf16.msra.mxu0 %v484
    %506 = vmatprep.subr.bf16.mxu0 0
    %507 = vmatpush1.bf16.msra.mxu0 %v485
    %508 = vmatprep.subr.bf16.mxu0 0
    %509 = vmatpush1.bf16.msra.mxu0 %v486
    %510 = vmatprep.subr.bf16.mxu0 0
    %511 = vmatpush1.bf16.msra.mxu0 %v487
    %512 = vmatprep.subr.bf16.mxu0 0
    %513 = vmatpush1.bf16.msra.mxu0 0
    %514 = vmatprep.subr.bf16.mxu0 0
    %515 = vmatpush1.bf16.msra.mxu0 0
    %516 = vmatprep.subr.bf16.mxu0 0
    %517 = vmatpush1.bf16.msra.mxu0 0
    %518 = vmatprep.subr.bf16.mxu0 0
    %519 = vmatpush1.bf16.msra.mxu0 0
    %520 = vmatprep.subr.bf16.mxu0 0
    %521 = vmatpush1.bf16.msra.mxu0 0
    %522 = vmatprep.subr.bf16.mxu0 0
    %523 = vmatpush1.bf16.msra.mxu0 0
    %524 = vmatprep.subr.bf16.mxu0 0
    %525 = vmatpush1.bf16.msra.mxu0 0
    %526 = vmatprep.subr.bf16.mxu0 0
    %527 = vmatpush1.bf16.msra.mxu0 0
    %528 = vmatprep.mubr.bf16.mxu0 0
    %529 = vmatmul.mubr.bf16.gmra.mrb[0].mxu0 %v415
    %v530 = vpop.f32.mrb[0].mxu0
    %v531 = vadd.f32 %v446, %v530
    %v532 = vpop.f32.mrb[0].mxu0
    %v533 = vpop.f32.mrb[0].mxu0
    %v534 = vadd.f32 %v446, %v533
    %v535 = vpop.f32.mrb[0].mxu0
    %536 = vmatprep.mubr.bf16.mxu0 0
    %537 = vmatmul.mubr.bf16.gmra.mrb[0].mxu0 %v416
    %v538 = vpop.f32.mrb[0].mxu0
    %v539 = vadd.f32 %v446, %v538
    %v540 = vpop.f32.mrb[0].mxu0
    %v541 = vpop.f32.mrb[0].mxu0
    %v542 = vadd.f32 %v446, %v541
    %v543 = vpop.f32.mrb[0].mxu0
    %544 = vmatprep.mubr.bf16.mxu0 0
    %545 = vmatmul.mubr.bf16.gmra.mrb[0].mxu0 %v417
    %v546 = vpop.f32.mrb[0].mxu0
    %v547 = vadd.f32 %v446, %v546
    %v548 = vpop.f32.mrb[0].mxu0
    %v549 = vpop.f32.mrb[0].mxu0
    %v550 = vadd.f32 %v446, %v549
    %v551 = vpop.f32.mrb[0].mxu0
    %552 = vmatprep.mubr.bf16.mxu0 0
    %553 = vmatmul.mubr.bf16.gmra.mrb[0].mxu0 %v418
    %v554 = vpop.f32.mrb[0].mxu0
    %v555 = vadd.f32 %v446, %v554
    %v556 = vpop.f32.mrb[0].mxu0
    %v557 = vpop.f32.mrb[0].mxu0
    %v558 = vadd.f32 %v446, %v557
    %v559 = vpop.f32.mrb[0].mxu0
    %560 = vmatprep.mubr.bf16.mxu0 0
    %561 = vmatmul.mubr.bf16.gmra.mrb[0].mxu0 %v419
    %v562 = vpop.f32.mrb[0].mxu0
    %v563 = vadd.f32 %v446, %v562
    %v564 = vpop.f32.mrb[0].mxu0
    %v565 = vpop.f32.mrb[0].mxu0
    %v566 = vadd.f32 %v446, %v565
    %v567 = vpop.f32.mrb[0].mxu0
    %568 = vmatprep.mubr.bf16.mxu0 0
    %569 = vmatmul.mubr.bf16.gmra.mrb[0].mxu0 %v420
    %v570 = vpop.f32.mrb[0].mxu0
    %v571 = vadd.f32 %v446, %v570
    %v572 = vpop.f32.mrb[0].mxu0
    %v573 = vpop.f32.mrb[0].mxu0
    %v574 = vadd.f32 %v446, %v573
    %v575 = vpop.f32.mrb[0].mxu0
    %576 = vmatprep.mubr.bf16.mxu0 0
    %577 = vmatmul.mubr.bf16.gmra.mrb[0].mxu0 %v421
    %v578 = vpop.f32.mrb[0].mxu0
    %v579 = vadd.f32 %v446, %v578
    %v580 = vpop.f32.mrb[0].mxu0
    %v581 = vpop.f32.mrb[0].mxu0
    %v582 = vadd.f32 %v446, %v581
    %v583 = vpop.f32.mrb[0].mxu0
    %584 = vmatprep.mubr.bf16.mxu0 0
    %585 = vmatmul.mubr.bf16.gmra.mrb[0].mxu0 %v422
    %v586 = vpop.f32.mrb[0].mxu0
    %v587 = vadd.f32 %v446, %v586
    %v588 = vpop.f32.mrb[0].mxu0
    %v589 = vpop.f32.mrb[0].mxu0
    %v590 = vadd.f32 %v446, %v589
    %v591 = vpop.f32.mrb[0].mxu0
    %592 = vdwg.mxu0
    %v593 = vmax.f32 %v531, 0.0
    %v594 = vmax.f32 %v534, 0.0
    %v595 = vmax.f32 %v539, 0.0
    %v596 = vmax.f32 %v542, 0.0
    %v597 = vmax.f32 %v547, 0.0
    %v598 = vmax.f32 %v550, 0.0
    %v599 = vmax.f32 %v555, 0.0
    %v600 = vmax.f32 %v558, 0.0
    %v601 = vmax.f32 %v563, 0.0
    %v602 = vmax.f32 %v566, 0.0
    %v603 = vmax.f32 %v571, 0.0
    %v604 = vmax.f32 %v574, 0.0
    %v605 = vmax.f32 %v579, 0.0
    %v606 = vmax.f32 %v582, 0.0
    %v607 = vmax.f32 %v587, 0.0
    %v608 = vmax.f32 %v590, 0.0
    %v609 = vpack.c.bf16 %v594, %v593
    %v610 = vpack.c.bf16 %v596, %v595
    %v611 = vpack.c.bf16 %v598, %v597
    %v612 = vpack.c.bf16 %v600, %v599
    %v613 = vpack.c.bf16 %v602, %v601
    %v614 = vpack.c.bf16 %v604, %v603
    %v615 = vpack.c.bf16 %v606, %v605
    %v616 = vpack.c.bf16 %v608, %v607
    %s617 = scalar_lea.vmem %s4, 128
    %v618 = vld [vmem:[%s617] sm:$0xf]
    %v619 = vld [vmem:[%s617 + $0x4] sm:$0xf]
    %v620 = vld [vmem:[%s617 + $0x8] sm:$0xf]
    %v621 = vld [vmem:[%s617 + $0xc] sm:$0xf]
    %v622 = vld [vmem:[%s617 + $0x10] sm:$0xf]
    %v623 = vld [vmem:[%s617 + $0x14] sm:$0xf]
    %v624 = vld [vmem:[%s617 + $0x18] sm:$0xf]
    %v625 = vld [vmem:[%s617 + $0x1c] sm:$0xf]
    %v626 = vld [vmem:[%s617 + $0x20] sm:$0xf]
    %v627 = vld [vmem:[%s617 + $0x24] sm:$0xf]
    %v628 = vld [vmem:[%s617 + $0x28] sm:$0xf]
    %v629 = vld [vmem:[%s617 + $0x2c] sm:$0xf]
    %v630 = vld [vmem:[%s617 + $0x30] sm:$0xf]
    %v631 = vld [vmem:[%s617 + $0x34] sm:$0xf]
    %v632 = vld [vmem:[%s617 + $0x38] sm:$0xf]
    %v633 = vld [vmem:[%s617 + $0x3c] sm:$0xf]
    %s634 = scalar_lea.vmem %s5, 2
    %v635 = vld [vmem:[%s634] sm:$0x1]
    %v637 = vlaneseq
    %v638 = vshrl.u32 %v637, 7
    %v639 = vsub.s32 0, %v638
    %v640 = vrot.slane %v635, %v639
    %v658 = vunpack.c.l.b16 %v618
    %v659 = vunpack.c.l.b16 %v619
    %v660 = vunpack.c.l.b16 %v620
    %v661 = vunpack.c.l.b16 %v621
    %v662 = vunpack.c.l.b16 %v622
    %v663 = vunpack.c.l.b16 %v623
    %v664 = vunpack.c.l.b16 %v624
    %v665 = vunpack.c.l.b16 %v625
    %v666 = vunpack.c.l.b16 %v626
    %v667 = vunpack.c.l.b16 %v627
    %v668 = vunpack.c.l.b16 %v628
    %v669 = vunpack.c.l.b16 %v629
    %v670 = vunpack.c.l.b16 %v630
    %v671 = vunpack.c.l.b16 %v631
    %v672 = vunpack.c.l.b16 %v632
    %v673 = vunpack.c.l.b16 %v633
    %v674 = vpack.c.b16 %v659, %v658
    %v675 = vpack.c.b16 %v661, %v660
    %v676 = vpack.c.b16 %v663, %v662
    %v677 = vpack.c.b16 %v665, %v664
    %v678 = vpack.c.b16 %v667, %v666
    %v679 = vpack.c.b16 %v669, %v668
    %v680 = vpack.c.b16 %v671, %v670
    %v681 = vpack.c.b16 %v673, %v672
    %690 = vmatprep.subr.bf16.mxu0 0
    %691 = vmatpush1.bf16.msra.mxu0 %v674
    %692 = vmatprep.subr.bf16.mxu0 0
    %693 = vmatpush1.bf16.msra.mxu0 %v675
    %694 = vmatprep.subr.bf16.mxu0 0
    %695 = vmatpush1.bf16.msra.mxu0 %v676
    %696 = vmatprep.subr.bf16.mxu0 0
    %697 = vmatpush1.bf16.msra.mxu0 %v677
    %698 = vmatprep.subr.bf16.mxu0 0
    %699 = vmatpush1.bf16.msra.mxu0 %v678
    %700 = vmatprep.subr.bf16.mxu0 0
    %701 = vmatpush1.bf16.msra.mxu0 %v679
    %702 = vmatprep.subr.bf16.mxu0 0
    %703 = vmatpush1.bf16.msra.mxu0 %v680
    %704 = vmatprep.subr.bf16.mxu0 0
    %705 = vmatpush1.bf16.msra.mxu0 %v681
    %706 = vmatprep.subr.bf16.mxu0 0
    %707 = vmatpush1.bf16.msra.mxu0 0
    %708 = vmatprep.subr.bf16.mxu0 0
    %709 = vmatpush1.bf16.msra.mxu0 0
    %710 = vmatprep.subr.bf16.mxu0 0
    %711 = vmatpush1.bf16.msra.mxu0 0
    %712 = vmatprep.subr.bf16.mxu0 0
    %713 = vmatpush1.bf16.msra.mxu0 0
    %714 = vmatprep.subr.bf16.mxu0 0
    %715 = vmatpush1.bf16.msra.mxu0 0
    %716 = vmatprep.subr.bf16.mxu0 0
    %717 = vmatpush1.bf16.msra.mxu0 0
    %718 = vmatprep.subr.bf16.mxu0 0
    %719 = vmatpush1.bf16.msra.mxu0 0
    %720 = vmatprep.subr.bf16.mxu0 0
    %721 = vmatpush1.bf16.msra.mxu0 0
    %722 = vmatprep.mubr.bf16.mxu0 0
    %723 = vmatmul.mubr.bf16.gmra.mrb[0].mxu0 %v609
    %v724 = vpop.f32.mrb[0].mxu0
    %v725 = vadd.f32 %v640, %v724
    %v726 = vpop.f32.mrb[0].mxu0
    %v727 = vpop.f32.mrb[0].mxu0
    %v728 = vadd.f32 %v640, %v727
    %v729 = vpop.f32.mrb[0].mxu0
    %730 = vmatprep.mubr.bf16.mxu0 0
    %731 = vmatmul.mubr.bf16.gmra.mrb[0].mxu0 %v610
    %v732 = vpop.f32.mrb[0].mxu0
    %v733 = vadd.f32 %v640, %v732
    %v734 = vpop.f32.mrb[0].mxu0
    %v735 = vpop.f32.mrb[0].mxu0
    %v736 = vadd.f32 %v640, %v735
    %v737 = vpop.f32.mrb[0].mxu0
    %738 = vmatprep.mubr.bf16.mxu0 0
    %739 = vmatmul.mubr.bf16.gmra.mrb[0].mxu0 %v611
    %v740 = vpop.f32.mrb[0].mxu0
    %v741 = vadd.f32 %v640, %v740
    %v742 = vpop.f32.mrb[0].mxu0
    %v743 = vpop.f32.mrb[0].mxu0
    %v744 = vadd.f32 %v640, %v743
    %v745 = vpop.f32.mrb[0].mxu0
    %746 = vmatprep.mubr.bf16.mxu0 0
    %747 = vmatmul.mubr.bf16.gmra.mrb[0].mxu0 %v612
    %v748 = vpop.f32.mrb[0].mxu0
    %v749 = vadd.f32 %v640, %v748
    %v750 = vpop.f32.mrb[0].mxu0
    %v751 = vpop.f32.mrb[0].mxu0
    %v752 = vadd.f32 %v640, %v751
    %v753 = vpop.f32.mrb[0].mxu0
    %754 = vmatprep.mubr.bf16.mxu0 0
    %755 = vmatmul.mubr.bf16.gmra.mrb[0].mxu0 %v613
    %v756 = vpop.f32.mrb[0].mxu0
    %v757 = vadd.f32 %v640, %v756
    %v758 = vpop.f32.mrb[0].mxu0
    %v759 = vpop.f32.mrb[0].mxu0
    %v760 = vadd.f32 %v640, %v759
    %v761 = vpop.f32.mrb[0].mxu0
    %762 = vmatprep.mubr.bf16.mxu0 0
    %763 = vmatmul.mubr.bf16.gmra.mrb[0].mxu0 %v614
    %v764 = vpop.f32.mrb[0].mxu0
    %v765 = vadd.f32 %v640, %v764
    %v766 = vpop.f32.mrb[0].mxu0
    %v767 = vpop.f32.mrb[0].mxu0
    %v768 = vadd.f32 %v640, %v767
    %v769 = vpop.f32.mrb[0].mxu0
    %770 = vmatprep.mubr.bf16.mxu0 0
    %771 = vmatmul.mubr.bf16.gmra.mrb[0].mxu0 %v615
    %v772 = vpop.f32.mrb[0].mxu0
    %v773 = vadd.f32 %v640, %v772
    %v774 = vpop.f32.mrb[0].mxu0
    %v775 = vpop.f32.mrb[0].mxu0
    %v776 = vadd.f32 %v640, %v775
    %v777 = vpop.f32.mrb[0].mxu0
    %778 = vmatprep.mubr.bf16.mxu0 0
    %779 = vmatmul.mubr.bf16.gmra.mrb[0].mxu0 %v616
    %v780 = vpop.f32.mrb[0].mxu0
    %v781 = vadd.f32 %v640, %v780
    %v782 = vpop.f32.mrb[0].mxu0
    %v783 = vpop.f32.mrb[0].mxu0
    %v784 = vadd.f32 %v640, %v783
    %v785 = vpop.f32.mrb[0].mxu0
    %786 = vdwg.mxu0
    %v787 = vmax.f32 %v725, 0.0
    %v788 = vmax.f32 %v728, 0.0
    %v789 = vmax.f32 %v733, 0.0
    %v790 = vmax.f32 %v736, 0.0
    %v791 = vmax.f32 %v741, 0.0
    %v792 = vmax.f32 %v744, 0.0
    %v793 = vmax.f32 %v749, 0.0
    %v794 = vmax.f32 %v752, 0.0
    %v795 = vmax.f32 %v757, 0.0
    %v796 = vmax.f32 %v760, 0.0
    %v797 = vmax.f32 %v765, 0.0
    %v798 = vmax.f32 %v768, 0.0
    %v799 = vmax.f32 %v773, 0.0
    %v800 = vmax.f32 %v776, 0.0
    %v801 = vmax.f32 %v781, 0.0
    %v802 = vmax.f32 %v784, 0.0
    %v803 = vpack.c.bf16 %v788, %v787
    %v804 = vpack.c.bf16 %v790, %v789
    %v805 = vpack.c.bf16 %v792, %v791
    %v806 = vpack.c.bf16 %v794, %v793
    %v807 = vpack.c.bf16 %v796, %v795
    %v808 = vpack.c.bf16 %v798, %v797
    %v809 = vpack.c.bf16 %v800, %v799
    %v810 = vpack.c.bf16 %v802, %v801
    %v811 = vunpack.c.l.bf16 %v803
    %v812 = vunpack.c.h.bf16 %v803
    %v813 = vunpack.c.l.bf16 %v804
    %v814 = vunpack.c.h.bf16 %v804
    %v815 = vunpack.c.l.bf16 %v805
    %v816 = vunpack.c.h.bf16 %v805
    %v817 = vunpack.c.l.bf16 %v806
    %v818 = vunpack.c.h.bf16 %v806
    %v819 = vunpack.c.l.bf16 %v807
    %v820 = vunpack.c.h.bf16 %v807
    %v821 = vunpack.c.l.bf16 %v808
    %v822 = vunpack.c.h.bf16 %v808
    %v823 = vunpack.c.l.bf16 %v809
    %v824 = vunpack.c.h.bf16 %v809
    %v825 = vunpack.c.l.bf16 %v810
    %v826 = vunpack.c.h.bf16 %v810
    %v827 = vld [vmem:[%s6] sm:$0x1]
    %v829 = vlaneseq
    %v830 = vshrl.u32 %v829, 7
    %v831 = vsub.s32 0, %v830
    %v832 = vrot.slane %v827, %v831
    %v834 = vmul.f32 %v811, %v832
    %v835 = vmul.f32 %v812, %v832
    %v836 = vmul.f32 %v813, %v832
    %v837 = vmul.f32 %v814, %v832
    %v838 = vmul.f32 %v815, %v832
    %v839 = vmul.f32 %v816, %v832
    %v840 = vmul.f32 %v817, %v832
    %v841 = vmul.f32 %v818, %v832
    %v842 = vmul.f32 %v819, %v832
    %v843 = vmul.f32 %v820, %v832
    %v844 = vmul.f32 %v821, %v832
    %v845 = vmul.f32 %v822, %v832
    %v846 = vmul.f32 %v823, %v832
    %v847 = vmul.f32 %v824, %v832
    %v848 = vmul.f32 %v825, %v832
    %v849 = vmul.f32 %v826, %v832
    %850 = vadd.xlane.f32.xlu0 %v834
    %v851 = vpop.xlane.xlu0 %850
    %852 = vadd.xlane.f32.xlu0 %v835
    %v853 = vpop.xlane.xlu0 %852
    %854 = vadd.xlane.f32.xlu0 %v836
    %v855 = vpop.xlane.xlu0 %854
    %856 = vadd.xlane.f32.xlu0 %v837
    %v857 = vpop.xlane.xlu0 %856
    %858 = vadd.xlane.f32.xlu0 %v838
    %v859 = vpop.xlane.xlu0 %858
    %860 = vadd.xlane.f32.xlu0 %v839
    %v861 = vpop.xlane.xlu0 %860
    %862 = vadd.xlane.f32.xlu0 %v840
    %v863 = vpop.xlane.xlu0 %862
    %864 = vadd.xlane.f32.xlu0 %v841
    %v865 = vpop.xlane.xlu0 %864
    %866 = vadd.xlane.f32.xlu0 %v842
    %v867 = vpop.xlane.xlu0 %866
    %868 = vadd.xlane.f32.xlu0 %v843
    %v869 = vpop.xlane.xlu0 %868
    %870 = vadd.xlane.f32.xlu0 %v844
    %v871 = vpop.xlane.xlu0 %870
    %872 = vadd.xlane.f32.xlu0 %v845
    %v873 = vpop.xlane.xlu0 %872
    %874 = vadd.xlane.f32.xlu0 %v846
    %v875 = vpop.xlane.xlu0 %874
    %876 = vadd.xlane.f32.xlu0 %v847
    %v877 = vpop.xlane.xlu0 %876
    %878 = vadd.xlane.f32.xlu0 %v848
    %v879 = vpop.xlane.xlu0 %878
    %880 = vadd.xlane.f32.xlu0 %v849
    %v881 = vpop.xlane.xlu0 %880
    %v882 = vstv %s29
    %v883 = vadd.f32 %v851, %v882
    %v884 = vadd.f32 %v853, %v882
    %v885 = vadd.f32 %v855, %v882
    %v886 = vadd.f32 %v857, %v882
    %v887 = vadd.f32 %v859, %v882
    %v888 = vadd.f32 %v861, %v882
    %v889 = vadd.f32 %v863, %v882
    %v890 = vadd.f32 %v865, %v882
    %v891 = vadd.f32 %v867, %v882
    %v892 = vadd.f32 %v869, %v882
    %v893 = vadd.f32 %v871, %v882
    %v894 = vadd.f32 %v873, %v882
    %v895 = vadd.f32 %v875, %v882
    %v896 = vadd.f32 %v877, %v882
    %v897 = vadd.f32 %v879, %v882
    %v898 = vadd.f32 %v881, %v882
    %v915 = vlaneseq
    %v916 = vand.u32 %v915, 127
    %v917 = vlaneseq
    %v918 = vshrl.u32 %v917, 7
    %v919 = vsub.s32 %v916, %v918
    %v920 = vrot.slane %v883, %v919
    %v921 = vadd.s32 %v916, 4294967288
    %v922 = vlaneseq
    %v923 = vshrl.u32 %v922, 7
    %v924 = vsub.s32 %v921, %v923
    %v925 = vrot.slane %v884, %v924
    %vm926 = vcmask 130112
    %v927 = vsel %vm926, %v925, %v920
    %v928 = vadd.s32 %v916, 4294967280
    %v929 = vlaneseq
    %v930 = vshrl.u32 %v929, 7
    %v931 = vsub.s32 %v928, %v930
    %v932 = vrot.slane %v885, %v931
    %vm933 = vcmask 195712
    %v934 = vsel %vm933, %v932, %v927
    %v935 = vadd.s32 %v916, 4294967272
    %v936 = vlaneseq
    %v937 = vshrl.u32 %v936, 7
    %v938 = vsub.s32 %v935, %v937
    %v939 = vrot.slane %v886, %v938
    %vm940 = vcmask 261312
    %v941 = vsel %vm940, %v939, %v934
    %v942 = vadd.s32 %v916, 4294967264
    %v943 = vlaneseq
    %v944 = vshrl.u32 %v943, 7
    %v945 = vsub.s32 %v942, %v944
    %v946 = vrot.slane %v887, %v945
    %vm947 = vcmask 326912
    %v948 = vsel %vm947, %v946, %v941
    %v949 = vadd.s32 %v916, 4294967256
    %v950 = vlaneseq
    %v951 = vshrl.u32 %v950, 7
    %v952 = vsub.s32 %v949, %v951
    %v953 = vrot.slane %v888, %v952
    %vm954 = vcmask 392512
    %v955 = vsel %vm954, %v953, %v948
    %v956 = vadd.s32 %v916, 4294967248
    %v957 = vlaneseq
    %v958 = vshrl.u32 %v957, 7
    %v959 = vsub.s32 %v956, %v958
    %v960 = vrot.slane %v889, %v959
    %vm961 = vcmask 458112
    %v962 = vsel %vm961, %v960, %v955
    %v963 = vadd.s32 %v916, 4294967240
    %v964 = vlaneseq
    %v965 = vshrl.u32 %v964, 7
    %v966 = vsub.s32 %v963, %v965
    %v967 = vrot.slane %v890, %v966
    %vm968 = vcmask 523712
    %v969 = vsel %vm968, %v967, %v962
    %v970 = vadd.s32 %v916, 4294967232
    %v971 = vlaneseq
    %v972 = vshrl.u32 %v971, 7
    %v973 = vsub.s32 %v970, %v972
    %v974 = vrot.slane %v891, %v973
    %vm975 = vcmask 589312
    %v976 = vsel %vm975, %v974, %v969
    %v977 = vadd.s32 %v916, 4294967224
    %v978 = vlaneseq
    %v979 = vshrl.u32 %v978, 7
    %v980 = vsub.s32 %v977, %v979
    %v981 = vrot.slane %v892, %v980
    %vm982 = vcmask 654912
    %v983 = vsel %vm982, %v981, %v976
    %v984 = vadd.s32 %v916, 4294967216
    %v985 = vlaneseq
    %v986 = vshrl.u32 %v985, 7
    %v987 = vsub.s32 %v984, %v986
    %v988 = vrot.slane %v893, %v987
    %vm989 = vcmask 720512
    %v990 = vsel %vm989, %v988, %v983
    %v991 = vadd.s32 %v916, 4294967208
    %v992 = vlaneseq
    %v993 = vshrl.u32 %v992, 7
    %v994 = vsub.s32 %v991, %v993
    %v995 = vrot.slane %v894, %v994
    %vm996 = vcmask 786112
    %v997 = vsel %vm996, %v995, %v990
    %v998 = vadd.s32 %v916, 4294967200
    %v999 = vlaneseq
    %v1000 = vshrl.u32 %v999, 7
    %v1001 = vsub.s32 %v998, %v1000
    %v1002 = vrot.slane %v895, %v1001
    %vm1003 = vcmask 851712
    %v1004 = vsel %vm1003, %v1002, %v997
    %v1005 = vadd.s32 %v916, 4294967192
    %v1006 = vlaneseq
    %v1007 = vshrl.u32 %v1006, 7
    %v1008 = vsub.s32 %v1005, %v1007
    %v1009 = vrot.slane %v896, %v1008
    %vm1010 = vcmask 917312
    %v1011 = vsel %vm1010, %v1009, %v1004
    %v1012 = vadd.s32 %v916, 4294967184
    %v1013 = vlaneseq
    %v1014 = vshrl.u32 %v1013, 7
    %v1015 = vsub.s32 %v1012, %v1014
    %v1016 = vrot.slane %v897, %v1015
    %vm1017 = vcmask 982912
    %v1018 = vsel %vm1017, %v1016, %v1011
    %v1019 = vadd.s32 %v916, 4294967176
    %v1020 = vlaneseq
    %v1021 = vshrl.u32 %v1020, 7
    %v1022 = vsub.s32 %v1019, %v1021
    %v1023 = vrot.slane %v898, %v1022
    %vm1024 = vcmask 1048512
    %v1025 = vsel %vm1024, %v1023, %v1018
    %1027 = vst [vmem:[#allocation3] sm:$0x1] %v1025
    %s1028 = scalar_lea.vmem %s2, 128
    %v1029 = vld [vmem:[%s1028] sm:$0xff]
    %v1030 = vld [vmem:[%s1028 + $0x8] sm:$0xff]
    %v1031 = vld [vmem:[%s1028 + $0x10] sm:$0xff]
    %v1032 = vld [vmem:[%s1028 + $0x18] sm:$0xff]
    %v1033 = vld [vmem:[%s1028 + $0x20] sm:$0xff]
    %v1034 = vld [vmem:[%s1028 + $0x28] sm:$0xff]
    %v1035 = vld [vmem:[%s1028 + $0x30] sm:$0xff]
    %v1036 = vld [vmem:[%s1028 + $0x38] sm:$0xff]
    %v1037 = vld [vmem:[%s1028 + $0x40] sm:$0xff]
    %v1038 = vld [vmem:[%s1028 + $0x48] sm:$0xff]
    %v1039 = vld [vmem:[%s1028 + $0x50] sm:$0xff]
    %v1040 = vld [vmem:[%s1028 + $0x58] sm:$0xff]
    %v1041 = vld [vmem:[%s1028 + $0x60] sm:$0xff]
    %v1042 = vld [vmem:[%s1028 + $0x68] sm:$0xff]
    %v1043 = vld [vmem:[%s1028 + $0x70] sm:$0xff]
    %v1044 = vld [vmem:[%s1028 + $0x78] sm:$0xff]
    %v1045 = vpack.c.bf16 %v1030, %v1029
    %v1046 = vpack.c.bf16 %v1032, %v1031
    %v1047 = vpack.c.bf16 %v1034, %v1033
    %v1048 = vpack.c.bf16 %v1036, %v1035
    %v1049 = vpack.c.bf16 %v1038, %v1037
    %v1050 = vpack.c.bf16 %v1040, %v1039
    %v1051 = vpack.c.bf16 %v1042, %v1041
    %v1052 = vpack.c.bf16 %v1044, %v1043
    %v1053 = vld [vmem:[%s3] sm:$0xf]
    %v1054 = vld [vmem:[%s3 + $0x4] sm:$0xf]
    %v1055 = vld [vmem:[%s3 + $0x8] sm:$0xf]
    %v1056 = vld [vmem:[%s3 + $0xc] sm:$0xf]
    %v1057 = vld [vmem:[%s3 + $0x10] sm:$0x3]
    %s1058 = scalar_lea.vmem %s1, 1
    %v1059 = vld [vmem:[%s1058] sm:$0x1]
    %v1061 = vlaneseq
    %v1062 = vshrl.u32 %v1061, 7
    %v1063 = vsub.s32 0, %v1062
    %v1064 = vrot.slane %v1059, %v1063
    %v1071 = vunpack.c.l.b16 %v1053
    %v1072 = vunpack.c.l.b16 %v1054
    %v1073 = vunpack.c.l.b16 %v1055
    %v1074 = vunpack.c.l.b16 %v1056
    %v1075 = vunpack.c.l.b16 %v1057
    %v1076 = vpack.c.b16 %v1072, %v1071
    %v1077 = vpack.c.b16 %v1074, %v1073
    %v1078 = vpack.c.b16 %v1075, %v1075
    %v1082 = vsel %vm81, %v1045, 0
    %v1085 = vsel %vm81, %v1046, 0
    %v1088 = vsel %vm81, %v1047, 0
    %v1091 = vsel %vm81, %v1048, 0
    %v1094 = vsel %vm81, %v1049, 0
    %v1097 = vsel %vm81, %v1050, 0
    %v1100 = vsel %vm81, %v1051, 0
    %v1103 = vsel %vm81, %v1052, 0
    %v1106 = vsel %vm106, %v1078, 0
    %1108 = vmatprep.subr.bf16.mxu0 0
    %1109 = vmatpush1.bf16.msra.mxu0 %v1076
    %1110 = vmatprep.subr.bf16.mxu0 0
    %1111 = vmatpush1.bf16.msra.mxu0 %v1077
    %1112 = vmatprep.subr.bf16.mxu0 0
    %1113 = vmatpush1.bf16.msra.mxu0 %v1106
    %1114 = vmatprep.subr.bf16.mxu0 0
    %1115 = vmatpush1.bf16.msra.mxu0 0
    %1116 = vmatprep.subr.bf16.mxu0 0
    %1117 = vmatpush1.bf16.msra.mxu0 0
    %1118 = vmatprep.subr.bf16.mxu0 0
    %1119 = vmatpush1.bf16.msra.mxu0 0
    %1120 = vmatprep.subr.bf16.mxu0 0
    %1121 = vmatpush1.bf16.msra.mxu0 0
    %1122 = vmatprep.subr.bf16.mxu0 0
    %1123 = vmatpush1.bf16.msra.mxu0 0
    %1124 = vmatprep.subr.bf16.mxu0 0
    %1125 = vmatpush1.bf16.msra.mxu0 0
    %1126 = vmatprep.subr.bf16.mxu0 0
    %1127 = vmatpush1.bf16.msra.mxu0 0
    %1128 = vmatprep.subr.bf16.mxu0 0
    %1129 = vmatpush1.bf16.msra.mxu0 0
    %1130 = vmatprep.subr.bf16.mxu0 0
    %1131 = vmatpush1.bf16.msra.mxu0 0
    %1132 = vmatprep.subr.bf16.mxu0 0
    %1133 = vmatpush1.bf16.msra.mxu0 0
    %1134 = vmatprep.subr.bf16.mxu0 0
    %1135 = vmatpush1.bf16.msra.mxu0 0
    %1136 = vmatprep.subr.bf16.mxu0 0
    %1137 = vmatpush1.bf16.msra.mxu0 0
    %1138 = vmatprep.subr.bf16.mxu0 0
    %1139 = vmatpush1.bf16.msra.mxu0 0
    %1140 = vmatprep.mubr.bf16.mxu0 0
    %1141 = vmatmul.mubr.bf16.gmra.mrb[0].mxu0 %v1082
    %v1142 = vpop.f32.mrb[0].mxu0
    %v1143 = vadd.f32 %v1064, %v1142
    %v1144 = vpop.f32.mrb[0].mxu0
    %v1145 = vpop.f32.mrb[0].mxu0
    %v1146 = vadd.f32 %v1064, %v1145
    %v1147 = vpop.f32.mrb[0].mxu0
    %1148 = vmatprep.mubr.bf16.mxu0 0
    %1149 = vmatmul.mubr.bf16.gmra.mrb[0].mxu0 %v1085
    %v1150 = vpop.f32.mrb[0].mxu0
    %v1151 = vadd.f32 %v1064, %v1150
    %v1152 = vpop.f32.mrb[0].mxu0
    %v1153 = vpop.f32.mrb[0].mxu0
    %v1154 = vadd.f32 %v1064, %v1153
    %v1155 = vpop.f32.mrb[0].mxu0
    %1156 = vmatprep.mubr.bf16.mxu0 0
    %1157 = vmatmul.mubr.bf16.gmra.mrb[0].mxu0 %v1088
    %v1158 = vpop.f32.mrb[0].mxu0
    %v1159 = vadd.f32 %v1064, %v1158
    %v1160 = vpop.f32.mrb[0].mxu0
    %v1161 = vpop.f32.mrb[0].mxu0
    %v1162 = vadd.f32 %v1064, %v1161
    %v1163 = vpop.f32.mrb[0].mxu0
    %1164 = vmatprep.mubr.bf16.mxu0 0
    %1165 = vmatmul.mubr.bf16.gmra.mrb[0].mxu0 %v1091
    %v1166 = vpop.f32.mrb[0].mxu0
    %v1167 = vadd.f32 %v1064, %v1166
    %v1168 = vpop.f32.mrb[0].mxu0
    %v1169 = vpop.f32.mrb[0].mxu0
    %v1170 = vadd.f32 %v1064, %v1169
    %v1171 = vpop.f32.mrb[0].mxu0
    %1172 = vmatprep.mubr.bf16.mxu0 0
    %1173 = vmatmul.mubr.bf16.gmra.mrb[0].mxu0 %v1094
    %v1174 = vpop.f32.mrb[0].mxu0
    %v1175 = vadd.f32 %v1064, %v1174
    %v1176 = vpop.f32.mrb[0].mxu0
    %v1177 = vpop.f32.mrb[0].mxu0
    %v1178 = vadd.f32 %v1064, %v1177
    %v1179 = vpop.f32.mrb[0].mxu0
    %1180 = vmatprep.mubr.bf16.mxu0 0
    %1181 = vmatmul.mubr.bf16.gmra.mrb[0].mxu0 %v1097
    %v1182 = vpop.f32.mrb[0].mxu0
    %v1183 = vadd.f32 %v1064, %v1182
    %v1184 = vpop.f32.mrb[0].mxu0
    %v1185 = vpop.f32.mrb[0].mxu0
    %v1186 = vadd.f32 %v1064, %v1185
    %v1187 = vpop.f32.mrb[0].mxu0
    %1188 = vmatprep.mubr.bf16.mxu0 0
    %1189 = vmatmul.mubr.bf16.gmra.mrb[0].mxu0 %v1100
    %v1190 = vpop.f32.mrb[0].mxu0
    %v1191 = vadd.f32 %v1064, %v1190
    %v1192 = vpop.f32.mrb[0].mxu0
    %v1193 = vpop.f32.mrb[0].mxu0
    %v1194 = vadd.f32 %v1064, %v1193
    %v1195 = vpop.f32.mrb[0].mxu0
    %1196 = vmatprep.mubr.bf16.mxu0 0
    %1197 = vmatmul.mubr.bf16.gmra.mrb[0].mxu0 %v1103
    %v1198 = vpop.f32.mrb[0].mxu0
    %v1199 = vadd.f32 %v1064, %v1198
    %v1200 = vpop.f32.mrb[0].mxu0
    %v1201 = vpop.f32.mrb[0].mxu0
    %v1202 = vadd.f32 %v1064, %v1201
    %v1203 = vpop.f32.mrb[0].mxu0
    %1204 = vdwg.mxu0
    %v1205 = vmax.f32 %v1143, 0.0
    %v1206 = vmax.f32 %v1146, 0.0
    %v1207 = vmax.f32 %v1151, 0.0
    %v1208 = vmax.f32 %v1154, 0.0
    %v1209 = vmax.f32 %v1159, 0.0
    %v1210 = vmax.f32 %v1162, 0.0
    %v1211 = vmax.f32 %v1167, 0.0
    %v1212 = vmax.f32 %v1170, 0.0
    %v1213 = vmax.f32 %v1175, 0.0
    %v1214 = vmax.f32 %v1178, 0.0
    %v1215 = vmax.f32 %v1183, 0.0
    %v1216 = vmax.f32 %v1186, 0.0
    %v1217 = vmax.f32 %v1191, 0.0
    %v1218 = vmax.f32 %v1194, 0.0
    %v1219 = vmax.f32 %v1199, 0.0
    %v1220 = vmax.f32 %v1202, 0.0
    %v1221 = vpack.c.bf16 %v1206, %v1205
    %v1222 = vpack.c.bf16 %v1208, %v1207
    %v1223 = vpack.c.bf16 %v1210, %v1209
    %v1224 = vpack.c.bf16 %v1212, %v1211
    %v1225 = vpack.c.bf16 %v1214, %v1213
    %v1226 = vpack.c.bf16 %v1216, %v1215
    %v1227 = vpack.c.bf16 %v1218, %v1217
    %v1228 = vpack.c.bf16 %v1220, %v1219
    %v1229 = vld [vmem:[%s4] sm:$0xf]
    %v1230 = vld [vmem:[%s4 + $0x4] sm:$0xf]
    %v1231 = vld [vmem:[%s4 + $0x8] sm:$0xf]
    %v1232 = vld [vmem:[%s4 + $0xc] sm:$0xf]
    %v1233 = vld [vmem:[%s4 + $0x10] sm:$0xf]
    %v1234 = vld [vmem:[%s4 + $0x14] sm:$0xf]
    %v1235 = vld [vmem:[%s4 + $0x18] sm:$0xf]
    %v1236 = vld [vmem:[%s4 + $0x1c] sm:$0xf]
    %v1237 = vld [vmem:[%s4 + $0x20] sm:$0xf]
    %v1238 = vld [vmem:[%s4 + $0x24] sm:$0xf]
    %v1239 = vld [vmem:[%s4 + $0x28] sm:$0xf]
    %v1240 = vld [vmem:[%s4 + $0x2c] sm:$0xf]
    %v1241 = vld [vmem:[%s4 + $0x30] sm:$0xf]
    %v1242 = vld [vmem:[%s4 + $0x34] sm:$0xf]
    %v1243 = vld [vmem:[%s4 + $0x38] sm:$0xf]
    %v1244 = vld [vmem:[%s4 + $0x3c] sm:$0xf]
    %v1245 = vld [vmem:[%s5] sm:$0x1]
    %v1247 = vlaneseq
    %v1248 = vshrl.u32 %v1247, 7
    %v1249 = vsub.s32 0, %v1248
    %v1250 = vrot.slane %v1245, %v1249
    %v1268 = vunpack.c.l.b16 %v1229
    %v1269 = vunpack.c.l.b16 %v1230
    %v1270 = vunpack.c.l.b16 %v1231
    %v1271 = vunpack.c.l.b16 %v1232
    %v1272 = vunpack.c.l.b16 %v1233
    %v1273 = vunpack.c.l.b16 %v1234
    %v1274 = vunpack.c.l.b16 %v1235
    %v1275 = vunpack.c.l.b16 %v1236
    %v1276 = vunpack.c.l.b16 %v1237
    %v1277 = vunpack.c.l.b16 %v1238
    %v1278 = vunpack.c.l.b16 %v1239
    %v1279 = vunpack.c.l.b16 %v1240
    %v1280 = vunpack.c.l.b16 %v1241
    %v1281 = vunpack.c.l.b16 %v1242
    %v1282 = vunpack.c.l.b16 %v1243
    %v1283 = vunpack.c.l.b16 %v1244
    %v1284 = vpack.c.b16 %v1269, %v1268
    %v1285 = vpack.c.b16 %v1271, %v1270
    %v1286 = vpack.c.b16 %v1273, %v1272
    %v1287 = vpack.c.b16 %v1275, %v1274
    %v1288 = vpack.c.b16 %v1277, %v1276
    %v1289 = vpack.c.b16 %v1279, %v1278
    %v1290 = vpack.c.b16 %v1281, %v1280
    %v1291 = vpack.c.b16 %v1283, %v1282
    %1300 = vmatprep.subr.bf16.mxu0 0
    %1301 = vmatpush1.bf16.msra.mxu0 %v1284
    %1302 = vmatprep.subr.bf16.mxu0 0
    %1303 = vmatpush1.bf16.msra.mxu0 %v1285
    %1304 = vmatprep.subr.bf16.mxu0 0
    %1305 = vmatpush1.bf16.msra.mxu0 %v1286
    %1306 = vmatprep.subr.bf16.mxu0 0
    %1307 = vmatpush1.bf16.msra.mxu0 %v1287
    %1308 = vmatprep.subr.bf16.mxu0 0
    %1309 = vmatpush1.bf16.msra.mxu0 %v1288
    %1310 = vmatprep.subr.bf16.mxu0 0
    %1311 = vmatpush1.bf16.msra.mxu0 %v1289
    %1312 = vmatprep.subr.bf16.mxu0 0
    %1313 = vmatpush1.bf16.msra.mxu0 %v1290
    %1314 = vmatprep.subr.bf16.mxu0 0
    %1315 = vmatpush1.bf16.msra.mxu0 %v1291
    %1316 = vmatprep.subr.bf16.mxu0 0
    %1317 = vmatpush1.bf16.msra.mxu0 0
    %1318 = vmatprep.subr.bf16.mxu0 0
    %1319 = vmatpush1.bf16.msra.mxu0 0
    %1320 = vmatprep.subr.bf16.mxu0 0
    %1321 = vmatpush1.bf16.msra.mxu0 0
    %1322 = vmatprep.subr.bf16.mxu0 0
    %1323 = vmatpush1.bf16.msra.mxu0 0
    %1324 = vmatprep.subr.bf16.mxu0 0
    %1325 = vmatpush1.bf16.msra.mxu0 0
    %1326 = vmatprep.subr.bf16.mxu0 0
    %1327 = vmatpush1.bf16.msra.mxu0 0
    %1328 = vmatprep.subr.bf16.mxu0 0
    %1329 = vmatpush1.bf16.msra.mxu0 0
    %1330 = vmatprep.subr.bf16.mxu0 0
    %1331 = vmatpush1.bf16.msra.mxu0 0
    %1332 = vmatprep.mubr.bf16.mxu0 0
    %1333 = vmatmul.mubr.bf16.gmra.mrb[0].mxu0 %v1221
    %v1334 = vpop.f32.mrb[0].mxu0
    %v1335 = vadd.f32 %v1250, %v1334
    %v1336 = vpop.f32.mrb[0].mxu0
    %v1337 = vpop.f32.mrb[0].mxu0
    %v1338 = vadd.f32 %v1250, %v1337
    %v1339 = vpop.f32.mrb[0].mxu0
    %1340 = vmatprep.mubr.bf16.mxu0 0
    %1341 = vmatmul.mubr.bf16.gmra.mrb[0].mxu0 %v1222
    %v1342 = vpop.f32.mrb[0].mxu0
    %v1343 = vadd.f32 %v1250, %v1342
    %v1344 = vpop.f32.mrb[0].mxu0
    %v1345 = vpop.f32.mrb[0].mxu0
    %v1346 = vadd.f32 %v1250, %v1345
    %v1347 = vpop.f32.mrb[0].mxu0
    %1348 = vmatprep.mubr.bf16.mxu0 0
    %1349 = vmatmul.mubr.bf16.gmra.mrb[0].mxu0 %v1223
    %v1350 = vpop.f32.mrb[0].mxu0
    %v1351 = vadd.f32 %v1250, %v1350
    %v1352 = vpop.f32.mrb[0].mxu0
    %v1353 = vpop.f32.mrb[0].mxu0
    %v1354 = vadd.f32 %v1250, %v1353
    %v1355 = vpop.f32.mrb[0].mxu0
    %1356 = vmatprep.mubr.bf16.mxu0 0
    %1357 = vmatmul.mubr.bf16.gmra.mrb[0].mxu0 %v1224
    %v1358 = vpop.f32.mrb[0].mxu0
    %v1359 = vadd.f32 %v1250, %v1358
    %v1360 = vpop.f32.mrb[0].mxu0
    %v1361 = vpop.f32.mrb[0].mxu0
    %v1362 = vadd.f32 %v1250, %v1361
    %v1363 = vpop.f32.mrb[0].mxu0
    %1364 = vmatprep.mubr.bf16.mxu0 0
    %1365 = vmatmul.mubr.bf16.gmra.mrb[0].mxu0 %v1225
    %v1366 = vpop.f32.mrb[0].mxu0
    %v1367 = vadd.f32 %v1250, %v1366
    %v1368 = vpop.f32.mrb[0].mxu0
    %v1369 = vpop.f32.mrb[0].mxu0
    %v1370 = vadd.f32 %v1250, %v1369
    %v1371 = vpop.f32.mrb[0].mxu0
    %1372 = vmatprep.mubr.bf16.mxu0 0
    %1373 = vmatmul.mubr.bf16.gmra.mrb[0].mxu0 %v1226
    %v1374 = vpop.f32.mrb[0].mxu0
    %v1375 = vadd.f32 %v1250, %v1374
    %v1376 = vpop.f32.mrb[0].mxu0
    %v1377 = vpop.f32.mrb[0].mxu0
    %v1378 = vadd.f32 %v1250, %v1377
    %v1379 = vpop.f32.mrb[0].mxu0
    %1380 = vmatprep.mubr.bf16.mxu0 0
    %1381 = vmatmul.mubr.bf16.gmra.mrb[0].mxu0 %v1227
    %v1382 = vpop.f32.mrb[0].mxu0
    %v1383 = vadd.f32 %v1250, %v1382
    %v1384 = vpop.f32.mrb[0].mxu0
    %v1385 = vpop.f32.mrb[0].mxu0
    %v1386 = vadd.f32 %v1250, %v1385
    %v1387 = vpop.f32.mrb[0].mxu0
    %1388 = vmatprep.mubr.bf16.mxu0 0
    %1389 = vmatmul.mubr.bf16.gmra.mrb[0].mxu0 %v1228
    %v1390 = vpop.f32.mrb[0].mxu0
    %v1391 = vadd.f32 %v1250, %v1390
    %v1392 = vpop.f32.mrb[0].mxu0
    %v1393 = vpop.f32.mrb[0].mxu0
    %v1394 = vadd.f32 %v1250, %v1393
    %v1395 = vpop.f32.mrb[0].mxu0
    %1396 = vdwg.mxu0
    %v1397 = vmax.f32 %v1335, 0.0
    %v1398 = vmax.f32 %v1338, 0.0
    %v1399 = vmax.f32 %v1343, 0.0
    %v1400 = vmax.f32 %v1346, 0.0
    %v1401 = vmax.f32 %v1351, 0.0
    %v1402 = vmax.f32 %v1354, 0.0
    %v1403 = vmax.f32 %v1359, 0.0
    %v1404 = vmax.f32 %v1362, 0.0
    %v1405 = vmax.f32 %v1367, 0.0
    %v1406 = vmax.f32 %v1370, 0.0
    %v1407 = vmax.f32 %v1375, 0.0
    %v1408 = vmax.f32 %v1378, 0.0
    %v1409 = vmax.f32 %v1383, 0.0
    %v1410 = vmax.f32 %v1386, 0.0
    %v1411 = vmax.f32 %v1391, 0.0
    %v1412 = vmax.f32 %v1394, 0.0
    %v1413 = vpack.c.bf16 %v1398, %v1397
    %v1414 = vpack.c.bf16 %v1400, %v1399
    %v1415 = vpack.c.bf16 %v1402, %v1401
    %v1416 = vpack.c.bf16 %v1404, %v1403
    %v1417 = vpack.c.bf16 %v1406, %v1405
    %v1418 = vpack.c.bf16 %v1408, %v1407
    %v1419 = vpack.c.bf16 %v1410, %v1409
    %v1420 = vpack.c.bf16 %v1412, %v1411
    %v1421 = vld [vmem:[%s423] sm:$0xf]
    %v1422 = vld [vmem:[%s423 + $0x4] sm:$0xf]
    %v1423 = vld [vmem:[%s423 + $0x8] sm:$0xf]
    %v1424 = vld [vmem:[%s423 + $0xc] sm:$0xf]
    %v1425 = vld [vmem:[%s423 + $0x10] sm:$0xf]
    %v1426 = vld [vmem:[%s423 + $0x14] sm:$0xf]
    %v1427 = vld [vmem:[%s423 + $0x18] sm:$0xf]
    %v1428 = vld [vmem:[%s423 + $0x1c] sm:$0xf]
    %v1429 = vld [vmem:[%s423 + $0x20] sm:$0xf]
    %v1430 = vld [vmem:[%s423 + $0x24] sm:$0xf]
    %v1431 = vld [vmem:[%s423 + $0x28] sm:$0xf]
    %v1432 = vld [vmem:[%s423 + $0x2c] sm:$0xf]
    %v1433 = vld [vmem:[%s423 + $0x30] sm:$0xf]
    %v1434 = vld [vmem:[%s423 + $0x34] sm:$0xf]
    %v1435 = vld [vmem:[%s423 + $0x38] sm:$0xf]
    %v1436 = vld [vmem:[%s423 + $0x3c] sm:$0xf]
    %v1437 = vld [vmem:[%s440] sm:$0x1]
    %v1439 = vlaneseq
    %v1440 = vshrl.u32 %v1439, 7
    %v1441 = vsub.s32 0, %v1440
    %v1442 = vrot.slane %v1437, %v1441
    %v1460 = vunpack.c.l.b16 %v1421
    %v1461 = vunpack.c.l.b16 %v1422
    %v1462 = vunpack.c.l.b16 %v1423
    %v1463 = vunpack.c.l.b16 %v1424
    %v1464 = vunpack.c.l.b16 %v1425
    %v1465 = vunpack.c.l.b16 %v1426
    %v1466 = vunpack.c.l.b16 %v1427
    %v1467 = vunpack.c.l.b16 %v1428
    %v1468 = vunpack.c.l.b16 %v1429
    %v1469 = vunpack.c.l.b16 %v1430
    %v1470 = vunpack.c.l.b16 %v1431
    %v1471 = vunpack.c.l.b16 %v1432
    %v1472 = vunpack.c.l.b16 %v1433
    %v1473 = vunpack.c.l.b16 %v1434
    %v1474 = vunpack.c.l.b16 %v1435
    %v1475 = vunpack.c.l.b16 %v1436
    %v1476 = vpack.c.b16 %v1461, %v1460
    %v1477 = vpack.c.b16 %v1463, %v1462
    %v1478 = vpack.c.b16 %v1465, %v1464
    %v1479 = vpack.c.b16 %v1467, %v1466
    %v1480 = vpack.c.b16 %v1469, %v1468
    %v1481 = vpack.c.b16 %v1471, %v1470
    %v1482 = vpack.c.b16 %v1473, %v1472
    %v1483 = vpack.c.b16 %v1475, %v1474
    %1492 = vmatprep.subr.bf16.mxu0 0
    %1493 = vmatpush1.bf16.msra.mxu0 %v1476
    %1494 = vmatprep.subr.bf16.mxu0 0
    %1495 = vmatpush1.bf16.msra.mxu0 %v1477
    %1496 = vmatprep.subr.bf16.mxu0 0
    %1497 = vmatpush1.bf16.msra.mxu0 %v1478
    %1498 = vmatprep.subr.bf16.mxu0 0
    %1499 = vmatpush1.bf16.msra.mxu0 %v1479
    %1500 = vmatprep.subr.bf16.mxu0 0
    %1501 = vmatpush1.bf16.msra.mxu0 %v1480
    %1502 = vmatprep.subr.bf16.mxu0 0
    %1503 = vmatpush1.bf16.msra.mxu0 %v1481
    %1504 = vmatprep.subr.bf16.mxu0 0
    %1505 = vmatpush1.bf16.msra.mxu0 %v1482
    %1506 = vmatprep.subr.bf16.mxu0 0
    %1507 = vmatpush1.bf16.msra.mxu0 %v1483
    %1508 = vmatprep.subr.bf16.mxu0 0
    %1509 = vmatpush1.bf16.msra.mxu0 0
    %1510 = vmatprep.subr.bf16.mxu0 0
    %1511 = vmatpush1.bf16.msra.mxu0 0
    %1512 = vmatprep.subr.bf16.mxu0 0
    %1513 = vmatpush1.bf16.msra.mxu0 0
    %1514 = vmatprep.subr.bf16.mxu0 0
    %1515 = vmatpush1.bf16.msra.mxu0 0
    %1516 = vmatprep.subr.bf16.mxu0 0
    %1517 = vmatpush1.bf16.msra.mxu0 0
    %1518 = vmatprep.subr.bf16.mxu0 0
    %1519 = vmatpush1.bf16.msra.mxu0 0
    %1520 = vmatprep.subr.bf16.mxu0 0
    %1521 = vmatpush1.bf16.msra.mxu0 0
    %1522 = vmatprep.subr.bf16.mxu0 0
    %1523 = vmatpush1.bf16.msra.mxu0 0
    %1524 = vmatprep.mubr.bf16.mxu0 0
    %1525 = vmatmul.mubr.bf16.gmra.mrb[0].mxu0 %v1413
    %v1526 = vpop.f32.mrb[0].mxu0
    %v1527 = vadd.f32 %v1442, %v1526
    %v1528 = vpop.f32.mrb[0].mxu0
    %v1529 = vpop.f32.mrb[0].mxu0
    %v1530 = vadd.f32 %v1442, %v1529
    %v1531 = vpop.f32.mrb[0].mxu0
    %1532 = vmatprep.mubr.bf16.mxu0 0
    %1533 = vmatmul.mubr.bf16.gmra.mrb[0].mxu0 %v1414
    %v1534 = vpop.f32.mrb[0].mxu0
    %v1535 = vadd.f32 %v1442, %v1534
    %v1536 = vpop.f32.mrb[0].mxu0
    %v1537 = vpop.f32.mrb[0].mxu0
    %v1538 = vadd.f32 %v1442, %v1537
    %v1539 = vpop.f32.mrb[0].mxu0
    %1540 = vmatprep.mubr.bf16.mxu0 0
    %1541 = vmatmul.mubr.bf16.gmra.mrb[0].mxu0 %v1415
    %v1542 = vpop.f32.mrb[0].mxu0
    %v1543 = vadd.f32 %v1442, %v1542
    %v1544 = vpop.f32.mrb[0].mxu0
    %v1545 = vpop.f32.mrb[0].mxu0
    %v1546 = vadd.f32 %v1442, %v1545
    %v1547 = vpop.f32.mrb[0].mxu0
    %1548 = vmatprep.mubr.bf16.mxu0 0
    %1549 = vmatmul.mubr.bf16.gmra.mrb[0].mxu0 %v1416
    %v1550 = vpop.f32.mrb[0].mxu0
    %v1551 = vadd.f32 %v1442, %v1550
    %v1552 = vpop.f32.mrb[0].mxu0
    %v1553 = vpop.f32.mrb[0].mxu0
    %v1554 = vadd.f32 %v1442, %v1553
    %v1555 = vpop.f32.mrb[0].mxu0
    %1556 = vmatprep.mubr.bf16.mxu0 0
    %1557 = vmatmul.mubr.bf16.gmra.mrb[0].mxu0 %v1417
    %v1558 = vpop.f32.mrb[0].mxu0
    %v1559 = vadd.f32 %v1442, %v1558
    %v1560 = vpop.f32.mrb[0].mxu0
    %v1561 = vpop.f32.mrb[0].mxu0
    %v1562 = vadd.f32 %v1442, %v1561
    %v1563 = vpop.f32.mrb[0].mxu0
    %1564 = vmatprep.mubr.bf16.mxu0 0
    %1565 = vmatmul.mubr.bf16.gmra.mrb[0].mxu0 %v1418
    %v1566 = vpop.f32.mrb[0].mxu0
    %v1567 = vadd.f32 %v1442, %v1566
    %v1568 = vpop.f32.mrb[0].mxu0
    %v1569 = vpop.f32.mrb[0].mxu0
    %v1570 = vadd.f32 %v1442, %v1569
    %v1571 = vpop.f32.mrb[0].mxu0
    %1572 = vmatprep.mubr.bf16.mxu0 0
    %1573 = vmatmul.mubr.bf16.gmra.mrb[0].mxu0 %v1419
    %v1574 = vpop.f32.mrb[0].mxu0
    %v1575 = vadd.f32 %v1442, %v1574
    %v1576 = vpop.f32.mrb[0].mxu0
    %v1577 = vpop.f32.mrb[0].mxu0
    %v1578 = vadd.f32 %v1442, %v1577
    %v1579 = vpop.f32.mrb[0].mxu0
    %1580 = vmatprep.mubr.bf16.mxu0 0
    %1581 = vmatmul.mubr.bf16.gmra.mrb[0].mxu0 %v1420
    %v1582 = vpop.f32.mrb[0].mxu0
    %v1583 = vadd.f32 %v1442, %v1582
    %v1584 = vpop.f32.mrb[0].mxu0
    %v1585 = vpop.f32.mrb[0].mxu0
    %v1586 = vadd.f32 %v1442, %v1585
    %v1587 = vpop.f32.mrb[0].mxu0
    %1588 = vdwg.mxu0
    %v1589 = vmax.f32 %v1527, 0.0
    %v1590 = vmax.f32 %v1530, 0.0
    %v1591 = vmax.f32 %v1535, 0.0
    %v1592 = vmax.f32 %v1538, 0.0
    %v1593 = vmax.f32 %v1543, 0.0
    %v1594 = vmax.f32 %v1546, 0.0
    %v1595 = vmax.f32 %v1551, 0.0
    %v1596 = vmax.f32 %v1554, 0.0
    %v1597 = vmax.f32 %v1559, 0.0
    %v1598 = vmax.f32 %v1562, 0.0
    %v1599 = vmax.f32 %v1567, 0.0
    %v1600 = vmax.f32 %v1570, 0.0
    %v1601 = vmax.f32 %v1575, 0.0
    %v1602 = vmax.f32 %v1578, 0.0
    %v1603 = vmax.f32 %v1583, 0.0
    %v1604 = vmax.f32 %v1586, 0.0
    %v1605 = vpack.c.bf16 %v1590, %v1589
    %v1606 = vpack.c.bf16 %v1592, %v1591
    %v1607 = vpack.c.bf16 %v1594, %v1593
    %v1608 = vpack.c.bf16 %v1596, %v1595
    %v1609 = vpack.c.bf16 %v1598, %v1597
    %v1610 = vpack.c.bf16 %v1600, %v1599
    %v1611 = vpack.c.bf16 %v1602, %v1601
    %v1612 = vpack.c.bf16 %v1604, %v1603
    %v1613 = vld [vmem:[%s617] sm:$0xf]
    %v1614 = vld [vmem:[%s617 + $0x4] sm:$0xf]
    %v1615 = vld [vmem:[%s617 + $0x8] sm:$0xf]
    %v1616 = vld [vmem:[%s617 + $0xc] sm:$0xf]
    %v1617 = vld [vmem:[%s617 + $0x10] sm:$0xf]
    %v1618 = vld [vmem:[%s617 + $0x14] sm:$0xf]
    %v1619 = vld [vmem:[%s617 + $0x18] sm:$0xf]
    %v1620 = vld [vmem:[%s617 + $0x1c] sm:$0xf]
    %v1621 = vld [vmem:[%s617 + $0x20] sm:$0xf]
    %v1622 = vld [vmem:[%s617 + $0x24] sm:$0xf]
    %v1623 = vld [vmem:[%s617 + $0x28] sm:$0xf]
    %v1624 = vld [vmem:[%s617 + $0x2c] sm:$0xf]
    %v1625 = vld [vmem:[%s617 + $0x30] sm:$0xf]
    %v1626 = vld [vmem:[%s617 + $0x34] sm:$0xf]
    %v1627 = vld [vmem:[%s617 + $0x38] sm:$0xf]
    %v1628 = vld [vmem:[%s617 + $0x3c] sm:$0xf]
    %v1629 = vld [vmem:[%s634] sm:$0x1]
    %v1631 = vlaneseq
    %v1632 = vshrl.u32 %v1631, 7
    %v1633 = vsub.s32 0, %v1632
    %v1634 = vrot.slane %v1629, %v1633
    %v1652 = vunpack.c.l.b16 %v1613
    %v1653 = vunpack.c.l.b16 %v1614
    %v1654 = vunpack.c.l.b16 %v1615
    %v1655 = vunpack.c.l.b16 %v1616
    %v1656 = vunpack.c.l.b16 %v1617
    %v1657 = vunpack.c.l.b16 %v1618
    %v1658 = vunpack.c.l.b16 %v1619
    %v1659 = vunpack.c.l.b16 %v1620
    %v1660 = vunpack.c.l.b16 %v1621
    %v1661 = vunpack.c.l.b16 %v1622
    %v1662 = vunpack.c.l.b16 %v1623
    %v1663 = vunpack.c.l.b16 %v1624
    %v1664 = vunpack.c.l.b16 %v1625
    %v1665 = vunpack.c.l.b16 %v1626
    %v1666 = vunpack.c.l.b16 %v1627
    %v1667 = vunpack.c.l.b16 %v1628
    %v1668 = vpack.c.b16 %v1653, %v1652
    %v1669 = vpack.c.b16 %v1655, %v1654
    %v1670 = vpack.c.b16 %v1657, %v1656
    %v1671 = vpack.c.b16 %v1659, %v1658
    %v1672 = vpack.c.b16 %v1661, %v1660
    %v1673 = vpack.c.b16 %v1663, %v1662
    %v1674 = vpack.c.b16 %v1665, %v1664
    %v1675 = vpack.c.b16 %v1667, %v1666
    %1684 = vmatprep.subr.bf16.mxu0 0
    %1685 = vmatpush1.bf16.msra.mxu0 %v1668
    %1686 = vmatprep.subr.bf16.mxu0 0
    %1687 = vmatpush1.bf16.msra.mxu0 %v1669
    %1688 = vmatprep.subr.bf16.mxu0 0
    %1689 = vmatpush1.bf16.msra.mxu0 %v1670
    %1690 = vmatprep.subr.bf16.mxu0 0
    %1691 = vmatpush1.bf16.msra.mxu0 %v1671
    %1692 = vmatprep.subr.bf16.mxu0 0
    %1693 = vmatpush1.bf16.msra.mxu0 %v1672
    %1694 = vmatprep.subr.bf16.mxu0 0
    %1695 = vmatpush1.bf16.msra.mxu0 %v1673
    %1696 = vmatprep.subr.bf16.mxu0 0
    %1697 = vmatpush1.bf16.msra.mxu0 %v1674
    %1698 = vmatprep.subr.bf16.mxu0 0
    %1699 = vmatpush1.bf16.msra.mxu0 %v1675
    %1700 = vmatprep.subr.bf16.mxu0 0
    %1701 = vmatpush1.bf16.msra.mxu0 0
    %1702 = vmatprep.subr.bf16.mxu0 0
    %1703 = vmatpush1.bf16.msra.mxu0 0
    %1704 = vmatprep.subr.bf16.mxu0 0
    %1705 = vmatpush1.bf16.msra.mxu0 0
    %1706 = vmatprep.subr.bf16.mxu0 0
    %1707 = vmatpush1.bf16.msra.mxu0 0
    %1708 = vmatprep.subr.bf16.mxu0 0
    %1709 = vmatpush1.bf16.msra.mxu0 0
    %1710 = vmatprep.subr.bf16.mxu0 0
    %1711 = vmatpush1.bf16.msra.mxu0 0
    %1712 = vmatprep.subr.bf16.mxu0 0
    %1713 = vmatpush1.bf16.msra.mxu0 0
    %1714 = vmatprep.subr.bf16.mxu0 0
    %1715 = vmatpush1.bf16.msra.mxu0 0
    %1716 = vmatprep.mubr.bf16.mxu0 0
    %1717 = vmatmul.mubr.bf16.gmra.mrb[0].mxu0 %v1605
    %v1718 = vpop.f32.mrb[0].mxu0
    %v1719 = vadd.f32 %v1634, %v1718
    %v1720 = vpop.f32.mrb[0].mxu0
    %v1721 = vpop.f32.mrb[0].mxu0
    %v1722 = vadd.f32 %v1634, %v1721
    %v1723 = vpop.f32.mrb[0].mxu0
    %1724 = vmatprep.mubr.bf16.mxu0 0
    %1725 = vmatmul.mubr.bf16.gmra.mrb[0].mxu0 %v1606
    %v1726 = vpop.f32.mrb[0].mxu0
    %v1727 = vadd.f32 %v1634, %v1726
    %v1728 = vpop.f32.mrb[0].mxu0
    %v1729 = vpop.f32.mrb[0].mxu0
    %v1730 = vadd.f32 %v1634, %v1729
    %v1731 = vpop.f32.mrb[0].mxu0
    %1732 = vmatprep.mubr.bf16.mxu0 0
    %1733 = vmatmul.mubr.bf16.gmra.mrb[0].mxu0 %v1607
    %v1734 = vpop.f32.mrb[0].mxu0
    %v1735 = vadd.f32 %v1634, %v1734
    %v1736 = vpop.f32.mrb[0].mxu0
    %v1737 = vpop.f32.mrb[0].mxu0
    %v1738 = vadd.f32 %v1634, %v1737
    %v1739 = vpop.f32.mrb[0].mxu0
    %1740 = vmatprep.mubr.bf16.mxu0 0
    %1741 = vmatmul.mubr.bf16.gmra.mrb[0].mxu0 %v1608
    %v1742 = vpop.f32.mrb[0].mxu0
    %v1743 = vadd.f32 %v1634, %v1742
    %v1744 = vpop.f32.mrb[0].mxu0
    %v1745 = vpop.f32.mrb[0].mxu0
    %v1746 = vadd.f32 %v1634, %v1745
    %v1747 = vpop.f32.mrb[0].mxu0
    %1748 = vmatprep.mubr.bf16.mxu0 0
    %1749 = vmatmul.mubr.bf16.gmra.mrb[0].mxu0 %v1609
    %v1750 = vpop.f32.mrb[0].mxu0
    %v1751 = vadd.f32 %v1634, %v1750
    %v1752 = vpop.f32.mrb[0].mxu0
    %v1753 = vpop.f32.mrb[0].mxu0
    %v1754 = vadd.f32 %v1634, %v1753
    %v1755 = vpop.f32.mrb[0].mxu0
    %1756 = vmatprep.mubr.bf16.mxu0 0
    %1757 = vmatmul.mubr.bf16.gmra.mrb[0].mxu0 %v1610
    %v1758 = vpop.f32.mrb[0].mxu0
    %v1759 = vadd.f32 %v1634, %v1758
    %v1760 = vpop.f32.mrb[0].mxu0
    %v1761 = vpop.f32.mrb[0].mxu0
    %v1762 = vadd.f32 %v1634, %v1761
    %v1763 = vpop.f32.mrb[0].mxu0
    %1764 = vmatprep.mubr.bf16.mxu0 0
    %1765 = vmatmul.mubr.bf16.gmra.mrb[0].mxu0 %v1611
    %v1766 = vpop.f32.mrb[0].mxu0
    %v1767 = vadd.f32 %v1634, %v1766
    %v1768 = vpop.f32.mrb[0].mxu0
    %v1769 = vpop.f32.mrb[0].mxu0
    %v1770 = vadd.f32 %v1634, %v1769
    %v1771 = vpop.f32.mrb[0].mxu0
    %1772 = vmatprep.mubr.bf16.mxu0 0
    %1773 = vmatmul.mubr.bf16.gmra.mrb[0].mxu0 %v1612
    %v1774 = vpop.f32.mrb[0].mxu0
    %v1775 = vadd.f32 %v1634, %v1774
    %v1776 = vpop.f32.mrb[0].mxu0
    %v1777 = vpop.f32.mrb[0].mxu0
    %v1778 = vadd.f32 %v1634, %v1777
    %v1779 = vpop.f32.mrb[0].mxu0
    %1780 = vdwg.mxu0
    %v1781 = vmax.f32 %v1719, 0.0
    %v1782 = vmax.f32 %v1722, 0.0
    %v1783 = vmax.f32 %v1727, 0.0
    %v1784 = vmax.f32 %v1730, 0.0
    %v1785 = vmax.f32 %v1735, 0.0
    %v1786 = vmax.f32 %v1738, 0.0
    %v1787 = vmax.f32 %v1743, 0.0
    %v1788 = vmax.f32 %v1746, 0.0
    %v1789 = vmax.f32 %v1751, 0.0
    %v1790 = vmax.f32 %v1754, 0.0
    %v1791 = vmax.f32 %v1759, 0.0
    %v1792 = vmax.f32 %v1762, 0.0
    %v1793 = vmax.f32 %v1767, 0.0
    %v1794 = vmax.f32 %v1770, 0.0
    %v1795 = vmax.f32 %v1775, 0.0
    %v1796 = vmax.f32 %v1778, 0.0
    %v1797 = vpack.c.bf16 %v1782, %v1781
    %v1798 = vpack.c.bf16 %v1784, %v1783
    %v1799 = vpack.c.bf16 %v1786, %v1785
    %v1800 = vpack.c.bf16 %v1788, %v1787
    %v1801 = vpack.c.bf16 %v1790, %v1789
    %v1802 = vpack.c.bf16 %v1792, %v1791
    %v1803 = vpack.c.bf16 %v1794, %v1793
    %v1804 = vpack.c.bf16 %v1796, %v1795
    %v1805 = vunpack.c.l.bf16 %v1797
    %v1806 = vunpack.c.h.bf16 %v1797
    %v1807 = vunpack.c.l.bf16 %v1798
    %v1808 = vunpack.c.h.bf16 %v1798
    %v1809 = vunpack.c.l.bf16 %v1799
    %v1810 = vunpack.c.h.bf16 %v1799
    %v1811 = vunpack.c.l.bf16 %v1800
    %v1812 = vunpack.c.h.bf16 %v1800
    %v1813 = vunpack.c.l.bf16 %v1801
    %v1814 = vunpack.c.h.bf16 %v1801
    %v1815 = vunpack.c.l.bf16 %v1802
    %v1816 = vunpack.c.h.bf16 %v1802
    %v1817 = vunpack.c.l.bf16 %v1803
    %v1818 = vunpack.c.h.bf16 %v1803
    %v1819 = vunpack.c.l.bf16 %v1804
    %v1820 = vunpack.c.h.bf16 %v1804
    %v1821 = vld [vmem:[%s6] sm:$0x1]
    %v1823 = vlaneseq
    %v1824 = vshrl.u32 %v1823, 7
    %v1825 = vsub.s32 0, %v1824
    %v1826 = vrot.slane %v1821, %v1825
    %v1828 = vmul.f32 %v1805, %v1826
    %v1829 = vmul.f32 %v1806, %v1826
    %v1830 = vmul.f32 %v1807, %v1826
    %v1831 = vmul.f32 %v1808, %v1826
    %v1832 = vmul.f32 %v1809, %v1826
    %v1833 = vmul.f32 %v1810, %v1826
    %v1834 = vmul.f32 %v1811, %v1826
    %v1835 = vmul.f32 %v1812, %v1826
    %v1836 = vmul.f32 %v1813, %v1826
    %v1837 = vmul.f32 %v1814, %v1826
    %v1838 = vmul.f32 %v1815, %v1826
    %v1839 = vmul.f32 %v1816, %v1826
    %v1840 = vmul.f32 %v1817, %v1826
    %v1841 = vmul.f32 %v1818, %v1826
    %v1842 = vmul.f32 %v1819, %v1826
    %v1843 = vmul.f32 %v1820, %v1826
    %1844 = vadd.xlane.f32.xlu0 %v1828
    %v1845 = vpop.xlane.xlu0 %1844
    %1846 = vadd.xlane.f32.xlu0 %v1829
    %v1847 = vpop.xlane.xlu0 %1846
    %1848 = vadd.xlane.f32.xlu0 %v1830
    %v1849 = vpop.xlane.xlu0 %1848
    %1850 = vadd.xlane.f32.xlu0 %v1831
    %v1851 = vpop.xlane.xlu0 %1850
    %1852 = vadd.xlane.f32.xlu0 %v1832
    %v1853 = vpop.xlane.xlu0 %1852
    %1854 = vadd.xlane.f32.xlu0 %v1833
    %v1855 = vpop.xlane.xlu0 %1854
    %1856 = vadd.xlane.f32.xlu0 %v1834
    %v1857 = vpop.xlane.xlu0 %1856
    %1858 = vadd.xlane.f32.xlu0 %v1835
    %v1859 = vpop.xlane.xlu0 %1858
    %1860 = vadd.xlane.f32.xlu0 %v1836
    %v1861 = vpop.xlane.xlu0 %1860
    %1862 = vadd.xlane.f32.xlu0 %v1837
    %v1863 = vpop.xlane.xlu0 %1862
    %1864 = vadd.xlane.f32.xlu0 %v1838
    %v1865 = vpop.xlane.xlu0 %1864
    %1866 = vadd.xlane.f32.xlu0 %v1839
    %v1867 = vpop.xlane.xlu0 %1866
    %1868 = vadd.xlane.f32.xlu0 %v1840
    %v1869 = vpop.xlane.xlu0 %1868
    %1870 = vadd.xlane.f32.xlu0 %v1841
    %v1871 = vpop.xlane.xlu0 %1870
    %1872 = vadd.xlane.f32.xlu0 %v1842
    %v1873 = vpop.xlane.xlu0 %1872
    %1874 = vadd.xlane.f32.xlu0 %v1843
    %v1875 = vpop.xlane.xlu0 %1874
    %v1876 = vadd.f32 %v1845, %v882
    %v1877 = vadd.f32 %v1847, %v882
    %v1878 = vadd.f32 %v1849, %v882
    %v1879 = vadd.f32 %v1851, %v882
    %v1880 = vadd.f32 %v1853, %v882
    %v1881 = vadd.f32 %v1855, %v882
    %v1882 = vadd.f32 %v1857, %v882
    %v1883 = vadd.f32 %v1859, %v882
    %v1884 = vadd.f32 %v1861, %v882
    %v1885 = vadd.f32 %v1863, %v882
    %v1886 = vadd.f32 %v1865, %v882
    %v1887 = vadd.f32 %v1867, %v882
    %v1888 = vadd.f32 %v1869, %v882
    %v1889 = vadd.f32 %v1871, %v882
    %v1890 = vadd.f32 %v1873, %v882
    %v1891 = vadd.f32 %v1875, %v882
    %v1908 = vlaneseq
    %v1909 = vshrl.u32 %v1908, 7
    %v1910 = vsub.s32 %v916, %v1909
    %v1911 = vrot.slane %v1876, %v1910
    %v1912 = vlaneseq
    %v1913 = vshrl.u32 %v1912, 7
    %v1914 = vsub.s32 %v921, %v1913
    %v1915 = vrot.slane %v1877, %v1914
    %v1916 = vsel %vm926, %v1915, %v1911
    %v1917 = vlaneseq
    %v1918 = vshrl.u32 %v1917, 7
    %v1919 = vsub.s32 %v928, %v1918
    %v1920 = vrot.slane %v1878, %v1919
    %v1921 = vsel %vm933, %v1920, %v1916
    %v1922 = vlaneseq
    %v1923 = vshrl.u32 %v1922, 7
    %v1924 = vsub.s32 %v935, %v1923
    %v1925 = vrot.slane %v1879, %v1924
    %v1926 = vsel %vm940, %v1925, %v1921
    %v1927 = vlaneseq
    %v1928 = vshrl.u32 %v1927, 7
    %v1929 = vsub.s32 %v942, %v1928
    %v1930 = vrot.slane %v1880, %v1929
    %v1931 = vsel %vm947, %v1930, %v1926
    %v1932 = vlaneseq
    %v1933 = vshrl.u32 %v1932, 7
    %v1934 = vsub.s32 %v949, %v1933
    %v1935 = vrot.slane %v1881, %v1934
    %v1936 = vsel %vm954, %v1935, %v1931
    %v1937 = vlaneseq
    %v1938 = vshrl.u32 %v1937, 7
    %v1939 = vsub.s32 %v956, %v1938
    %v1940 = vrot.slane %v1882, %v1939
    %v1941 = vsel %vm961, %v1940, %v1936
    %v1942 = vlaneseq
    %v1943 = vshrl.u32 %v1942, 7
    %v1944 = vsub.s32 %v963, %v1943
    %v1945 = vrot.slane %v1883, %v1944
    %v1946 = vsel %vm968, %v1945, %v1941
    %v1947 = vlaneseq
    %v1948 = vshrl.u32 %v1947, 7
    %v1949 = vsub.s32 %v970, %v1948
    %v1950 = vrot.slane %v1884, %v1949
    %v1951 = vsel %vm975, %v1950, %v1946
    %v1952 = vlaneseq
    %v1953 = vshrl.u32 %v1952, 7
    %v1954 = vsub.s32 %v977, %v1953
    %v1955 = vrot.slane %v1885, %v1954
    %v1956 = vsel %vm982, %v1955, %v1951
    %v1957 = vlaneseq
    %v1958 = vshrl.u32 %v1957, 7
    %v1959 = vsub.s32 %v984, %v1958
    %v1960 = vrot.slane %v1886, %v1959
    %v1961 = vsel %vm989, %v1960, %v1956
    %v1962 = vlaneseq
    %v1963 = vshrl.u32 %v1962, 7
    %v1964 = vsub.s32 %v991, %v1963
    %v1965 = vrot.slane %v1887, %v1964
    %v1966 = vsel %vm996, %v1965, %v1961
    %v1967 = vlaneseq
    %v1968 = vshrl.u32 %v1967, 7
    %v1969 = vsub.s32 %v998, %v1968
    %v1970 = vrot.slane %v1888, %v1969
    %v1971 = vsel %vm1003, %v1970, %v1966
    %v1972 = vlaneseq
    %v1973 = vshrl.u32 %v1972, 7
    %v1974 = vsub.s32 %v1005, %v1973
    %v1975 = vrot.slane %v1889, %v1974
    %v1976 = vsel %vm1010, %v1975, %v1971
    %v1977 = vlaneseq
    %v1978 = vshrl.u32 %v1977, 7
    %v1979 = vsub.s32 %v1012, %v1978
    %v1980 = vrot.slane %v1890, %v1979
    %v1981 = vsel %vm1017, %v1980, %v1976
    %v1982 = vlaneseq
    %v1983 = vshrl.u32 %v1982, 7
    %v1984 = vsub.s32 %v1019, %v1983
    %v1985 = vrot.slane %v1891, %v1984
    %v1986 = vsel %vm1024, %v1985, %v1981
    %1988 = vst [vmem:[#allocation3 + $0x1] sm:$0x1] %v1986
    // Predicated region
    $region30: #{tpu_custom_call.1} parent=1 // pred_check
      _
    $region31: #{tpu_custom_call.1} parent=1 // pred_check_branch
      %1990 = sbr.rel (0) target = $region33
    $region32: #{tpu_custom_call.1} parent=1 // pred_region
      %s1992 = ssub.s32 32, 32
      %1993 = vsyncadd [#allocation4], %s1992
      %s1995 = sshll.u32 [#allocation3], 4
      %s1996 = int_to_ptr.vmem [resolvable:$true] %s1995
      %1998 = dma.vmem_to_hbm [thread:$0]  %s1996, 32, %s7, [#allocation4]
    $region33: #{tpu_custom_call.1} parent=1 // pred_fallthru
      _
    // Predicated region
    $region34: #{tpu_custom_call.1} parent=1 // pred_check
      _
    $region35: #{tpu_custom_call.1} parent=1 // pred_check_branch
      %2000 = sbr.rel (0) target = $region37
    $region36: #{tpu_custom_call.1} parent=1 // pred_region
      %2001 = dma.done [#allocation4], 32
    $region37: #{tpu_custom_call.1} parent=1 // pred_fallthru
      _
    %2002 = vsyncpa [#allocation4], 1

</llo_original>
